<compile_context>
chip_gen: v7x
topology: tpu7x:2x2x1
jax: 0.10.0
libtpu: 0.0.40
codegen_flags: <defaults>
</compile_context>

<pallas_src>
import math
import numpy as np
import jax
import jax.numpy as jnp
from jax import lax
from jax.experimental import pallas as pl
from jax.experimental.pallas import tpu as pltpu

HID = 32
HEADS = 4
HEAD_DIM = HID // HEADS
PF = 64
EPS = 1e-5                           # torch.nn.LayerNorm default eps
INV_SCALE = 1.0 / math.sqrt(HEAD_DIM)
NEG_INF = -10000000000.0             # masked_fill value in the PyTorch module


# --------------------------------- kernel ----------------------------------

def decoder_layer_kernel(trg_ref, enc_ref, tmask_ref, smask_ref,
                         w_sqkv_ref, b_sqkv_ref, w_so_ref, b_so_ref,
                         w_cq_ref, b_cq_ref, w_ckv_ref, b_ckv_ref,
                         w_co_ref, b_co_ref, w_f1_ref, b_f1_ref,
                         w_f2_ref, b_f2_ref, ln_ref,
                         bd_s_ref, seg_s_ref, bd_c_ref, seg_c_ref,
                         out_ref, attn_ref):
    Lt, D = trg_ref.shape[1], trg_ref.shape[2]
    Ls = enc_ref.shape[1]

    trg = trg_ref[0]                       # (Lt, D)   -- one batch element per step
    enc = enc_ref[0]                       # (Ls, D)
    ln = ln_ref[...]                       # (6, D) packed LayerNorm params

    zero = jnp.float32(0.0)
    neg = jnp.float32(NEG_INF)
    # Additive masks (same for every head), tiled once along the head-concat lane axis.
    # NOTE: additive -1e10 (vs masked_fill) is equivalent whenever every softmax row has
    # at least one unmasked entry (true for causal trg masks / non-empty src rows).
    tbias_all = jnp.tile(jnp.where(tmask_ref[0] == 0, neg, zero), (1, HEADS))  # (Lt, HEADS*Lt)
    sbias_all = jnp.tile(jnp.where(smask_ref[0] == 0, neg, zero), (1, HEADS))  # (*, HEADS*Ls)

    # TODO(synk): dropout is identity (eval-mode semantics); training-mode RNG dropout
    # is not reproduced.

    def layer_norm(x, g, b):
        mu = jnp.mean(x, axis=-1, keepdims=True)
        var = jnp.mean(jnp.square(x - mu), axis=-1, keepdims=True)
        return (x - mu) * lax.rsqrt(var + EPS) * g + b

    def mha(Q, K, V, bias_all, bd, seg, o_w, o_b):
        # Q (Lq, D) already scaled by 1/sqrt(head_dim); K/V (Lk, D).
        # bd  (HEADS*Lk, D): block-diagonal head selector (1 where row-head == col-head).
        # seg (HEADS*Lk, HEADS*Lk): block-ones matrix for segmented row sums.
        K_bd = jnp.tile(K, (HEADS, 1)) * bd          # (HEADS*Lk, D)
        V_bd = jnp.tile(V, (HEADS, 1)) * bd          # (HEADS*Lk, D)
        # All heads' energies in ONE MXU push (contraction = D = 32):
        # e[q, h*Lk+j] = Q_h[q] . K_h[j]
        e = lax.dot_general(Q, K_bd, (((1,), (1,)), ((), ())),
                            preferred_element_type=jnp.float32) + bias_all
        # One stacked softmax over the whole (Lq, HEADS*Lk) slab; the full-row max is a
        # valid stabilizer for every head segment (it is constant within each row).
        m = jnp.max(e, axis=-1, keepdims=True)
        p = jnp.exp(e - m)
        # Per-head denominators, broadcast back per segment, via one MXU push.
        denom = jnp.dot(p, seg, preferred_element_type=jnp.float32)
        a = p * pl.reciprocal(denom, approx=False)   # (Lq, HEADS*Lk)
        # Context comes out already head-concatenated -> single output projection.
        ctx = jnp.dot(a, V_bd, preferred_element_type=jnp.float32)   # (Lq, D)
        out = jnp.dot(ctx, o_w, preferred_element_type=jnp.float32) + o_b
        return out, a

    # 1) self-attention (fused QKV projection: one MXU pass) + residual + LayerNorm
    s_qkv = (jnp.dot(trg, w_sqkv_ref[...], preferred_element_type=jnp.float32)
             + b_sqkv_ref[...])                                       # (Lt, 3D)
    sa, _ = mha(s_qkv[:, 0:D] * INV_SCALE, s_qkv[:, D:2 * D], s_qkv[:, 2 * D:3 * D],
                tbias_all, bd_s_ref[...], seg_s_ref[...],
                w_so_ref[...], b_so_ref[...])
    x1 = layer_norm(trg + sa, ln[0:1, :], ln[1:2, :])

    # 2) encoder (cross) attention (fused K|V projection) + residual + LayerNorm
    cQ = (jnp.dot(x1, w_cq_ref[...], preferred_element_type=jnp.float32)
          + b_cq_ref[...]) * INV_SCALE
    ckv = (jnp.dot(enc, w_ckv_ref[...], preferred_element_type=jnp.float32)
           + b_ckv_ref[...])                                          # (Ls, 2D)
    ca, a_cross = mha(cQ, ckv[:, 0:D], ckv[:, D:2 * D],
                      sbias_all, bd_c_ref[...], seg_c_ref[...],
                      w_co_ref[...], b_co_ref[...])
    x2 = layer_norm(x1 + ca, ln[2:3, :], ln[3:4, :])

    # 3) position-wise feed-forward + residual + LayerNorm
    hh = jnp.maximum(jnp.dot(x2, w_f1_ref[...], preferred_element_type=jnp.float32)
                     + b_f1_ref[...], 0.0)
    ff = jnp.dot(hh, w_f2_ref[...], preferred_element_type=jnp.float32) + b_f2_ref[...]
    y = layer_norm(x2 + ff, ln[4:5, :], ln[5:6, :])

    out_ref[0, :, :] = y
    # Cross-attn probabilities already live head-concatenated along lanes; store each
    # head's (Lt, Ls) slice directly (no jnp.stack relayout).
    for h in range(HEADS):
        attn_ref[0, h, :, :] = a_cross[:, h * Ls:(h + 1) * Ls]


# -------------------------------- wrapper -----------------------------------

def _head_masks(Lk):
    """Host-side constants: block-diagonal head selector and block-ones matrix."""
    r = np.arange(HEADS * Lk)[:, None]
    bd = (r // Lk == np.arange(HID)[None, :] // HEAD_DIM).astype(np.float32)        # (H*Lk, D)
    seg = (r // Lk == np.arange(HEADS * Lk)[None, :] // Lk).astype(np.float32)      # (H*Lk, H*Lk)
    return jnp.asarray(bd), jnp.asarray(seg)


def _decoder_layer_impl(trg, enc_src, trg_mask, src_mask, params):
    """trg: (B, Lt, HID); enc_src: (B, Ls, HID); trg_mask: (B, Lt, Lt) int;
    src_mask: (B, 1, Ls) or (B, Lt, Ls) int. Returns (out, cross_attention)."""
    B, Lt, D = trg.shape
    Ls = enc_src.shape[1]
    assert D == HID

    (s_wq, s_bq, s_wk, s_bk, s_wv, s_bv, s_wo, s_bo,
     e_wq, e_bq, e_wk, e_bk, e_wv, e_bv, e_wo, e_bo,
     f_w1, f_b1, f_w2, f_b2,
     ln1_g, ln1_b, ln2_g, ln2_b, ln3_g, ln3_b) = params

    # Fuse Q|K|V (self) and K|V (cross) so each projection is one MXU pass; every
    # array below starts at lane 0 (no misaligned in-kernel weight slices).
    w_sqkv = jnp.concatenate([s_wq, s_wk, s_wv], axis=1)      # (D, 3D)
    b_sqkv = jnp.concatenate([s_bq, s_bk, s_bv], axis=1)      # (1, 3D)
    w_ckv = jnp.concatenate([e_wk, e_wv], axis=1)             # (D, 2D)
    b_ckv = jnp.concatenate([e_bk, e_bv], axis=1)             # (1, 2D)
    ln = jnp.concatenate([ln1_g, ln1_b, ln2_g, ln2_b, ln3_g, ln3_b], axis=0)  # (6, D)

    bd_s, seg_s = _head_masks(Lt)
    bd_c, seg_c = _head_masks(Ls)

    consts = (w_sqkv, b_sqkv, s_wo, s_bo, e_wq, e_bq, w_ckv, b_ckv,
              e_wo, e_bo, f_w1, f_b1, f_w2, f_b2, ln,
              bd_s, seg_s, bd_c, seg_c)

    data = (trg, enc_src, trg_mask.astype(jnp.int32), src_mask.astype(jnp.int32))

    in_specs = [
        pl.BlockSpec((1, Lt, D), lambda b: (b, 0, 0)),                     # trg
        pl.BlockSpec((1, Ls, D), lambda b: (b, 0, 0)),                     # enc_src
        pl.BlockSpec((1, Lt, Lt), lambda b: (b, 0, 0)),                    # trg_mask
        pl.BlockSpec((1, src_mask.shape[1], Ls), lambda b: (b, 0, 0)),     # src_mask
    ]
    for c in consts:   # parameters / constants: same block every step -> DMA'd once
        in_specs.append(pl.BlockSpec(c.shape, lambda b, _n=c.ndim: (0,) * _n))

    out_shape = (jax.ShapeDtypeStruct((B, Lt, D), jnp.float32),
                 jax.ShapeDtypeStruct((B, HEADS, Lt, Ls), jnp.float32))
    out_specs = (pl.BlockSpec((1, Lt, D), lambda b: (b, 0, 0)),
                 pl.BlockSpec((1, HEADS, Lt, Ls), lambda b: (b, 0, 0, 0)))

    # Batch-parallel grid: one batch element per step (uses both TCs on v7x;
    # measured-neutral on single-TC v5e/v6e).
    return pl.pallas_call(
        decoder_layer_kernel,
        grid=(B,),
        in_specs=in_specs,
        out_specs=out_specs,
        out_shape=out_shape,
        compiler_params=pltpu.CompilerParams(dimension_semantics=("parallel",)),
    )(*data, *consts)


decoder_layer = jax.jit(_decoder_layer_impl)


# ------------------------- deterministic param init -------------------------

def init_params(key):
    keys = iter(jax.random.split(key, 26))

    def lin(din, dout):
        w = jax.random.normal(next(keys), (din, dout), jnp.float32) * 0.1
        b = jax.random.normal(next(keys), (1, dout), jnp.float32) * 0.1
        return [w, b]

    def lnorm(d):
        g = 1.0 + 0.1 * jax.random.normal(next(keys), (1, d), jnp.float32)
        b = 0.1 * jax.random.normal(next(keys), (1, d), jnp.float32)
        return [g, b]

    p = []
    for _ in range(2):               # self-attn, enc-attn
        for _ in range(4):           # q, k, v, o
            p += lin(HID, HID)
    p += lin(HID, PF)                # fc_1
    p += lin(PF, HID)                # fc_2
    for _ in range(3):               # 3 LayerNorms
        p += lnorm(HID)
    return p


# -------------------------- pure-JAX reference ------------------------------

def reference(trg, enc_src, trg_mask, src_mask, params):
    (s_wq, s_bq, s_wk, s_bk, s_wv, s_bv, s_wo, s_bo,
     e_wq, e_bq, e_wk, e_bk, e_wv, e_bv, e_wo, e_bo,
     f_w1, f_b1, f_w2, f_b2,
     ln1_g, ln1_b, ln2_g, ln2_b, ln3_g, ln3_b) = params
    scale = math.sqrt(HEAD_DIM)

    def linear(x, w, b):
        return x @ w + b[0]

    def ln(x, g, b):
        mu = x.mean(-1, keepdims=True)
        var = ((x - mu) ** 2).mean(-1, keepdims=True)
        return (x - mu) / jnp.sqrt(var + EPS) * g[0] + b[0]

    def mha(q_in, kv_in, mask, wq, bq, wk, bk, wv, bv, wo, bo):
        B, Lq, D = q_in.shape
        Lk = kv_in.shape[1]
        Q = linear(q_in, wq, bq).reshape(B, Lq, HEADS, HEAD_DIM).transpose(0, 2, 1, 3)
        K = linear(kv_in, wk, bk).reshape(B, Lk, HEADS, HEAD_DIM).transpose(0, 2, 1, 3)
        V = linear(kv_in, wv, bv).reshape(B, Lk, HEADS, HEAD_DIM).transpose(0, 2, 1, 3)
        energy = jnp.einsum('bhqd,bhkd->bhqk', Q, K) / scale
        energy = jnp.where(mask[:, None, :, :] == 0, NEG_INF, energy)
        attn = jax.nn.softmax(energy, axis=-1)
        x = jnp.einsum('bhqk,bhkd->bhqd', attn, V).transpose(0, 2, 1, 3).reshape(B, Lq, D)
        return linear(x, wo, bo), attn

    sa, _ = mha(trg, trg, trg_mask, s_wq, s_bq, s_wk, s_bk, s_wv, s_bv, s_wo, s_bo)
    x1 = ln(trg + sa, ln1_g, ln1_b)
    ca, attn = mha(x1, enc_src, src_mask, e_wq, e_bq, e_wk, e_bk, e_wv, e_bv, e_wo, e_bo)
    x2 = ln(x1 + ca, ln2_g, ln2_b)
    ff = linear(jnp.maximum(linear(x2, f_w1, f_b1), 0.0), f_w2, f_b2)
    return ln(x2 + ff, ln3_g, ln3_b), attn


# ---------------------------------- main ------------------------------------

if __name__ == "__main__":
    key = jax.random.PRNGKey(0)
    B, Lt, Ls = 2, 8, 10
    k1, k2, kp = jax.random.split(key, 3)

    trg = jax.random.normal(k1, (B, Lt, HID), jnp.float32)
    enc_src = jax.random.normal(k2, (B, Ls, HID), jnp.float32)

    # causal target mask (B, Lt, Lt); compact per-batch source padding mask (B, 1, Ls)
    causal = jnp.tril(jnp.ones((Lt, Lt), jnp.int32))
    trg_mask = jnp.broadcast_to(causal, (B, Lt, Lt))
    src_valid = jnp.array([[1] * Ls, [1] * (Ls - 3) + [0] * 3], jnp.int32)  # (B, Ls)
    src_mask = src_valid[:, None, :]                                        # (B, 1, Ls)

    params = init_params(kp)

    out, attn = decoder_layer(trg, enc_src, trg_mask, src_mask, params)
    jax.block_until_ready((out, attn))

    ref_out, ref_attn = reference(trg, enc_src, trg_mask, src_mask, params)
    assert jnp.allclose(out, ref_out, atol=1e-4, rtol=1e-4), "output mismatch"
    assert jnp.allclose(attn, ref_attn, atol=1e-4, rtol=1e-4), "attention mismatch"

    print("KERNEL_OK")
</pallas_src>

<mosaic_0001>
module attributes {stable_mosaic.version = 11 : i64} {
  func.func @decoder_layer_kernel(%arg0: i32, %arg1: memref<1x8x32xf32, #tpu.memory_space<vmem>>, %arg2: memref<1x10x32xf32, #tpu.memory_space<vmem>>, %arg3: memref<1x8x8xi32, #tpu.memory_space<vmem>>, %arg4: memref<1x1x10xi32, #tpu.memory_space<vmem>>, %arg5: memref<32x96xf32, #tpu.memory_space<vmem>>, %arg6: memref<1x96xf32, #tpu.memory_space<vmem>>, %arg7: memref<32x32xf32, #tpu.memory_space<vmem>>, %arg8: memref<1x32xf32, #tpu.memory_space<vmem>>, %arg9: memref<32x32xf32, #tpu.memory_space<vmem>>, %arg10: memref<1x32xf32, #tpu.memory_space<vmem>>, %arg11: memref<32x64xf32, #tpu.memory_space<vmem>>, %arg12: memref<1x64xf32, #tpu.memory_space<vmem>>, %arg13: memref<32x32xf32, #tpu.memory_space<vmem>>, %arg14: memref<1x32xf32, #tpu.memory_space<vmem>>, %arg15: memref<32x64xf32, #tpu.memory_space<vmem>>, %arg16: memref<1x64xf32, #tpu.memory_space<vmem>>, %arg17: memref<64x32xf32, #tpu.memory_space<vmem>>, %arg18: memref<1x32xf32, #tpu.memory_space<vmem>>, %arg19: memref<6x32xf32, #tpu.memory_space<vmem>>, %arg20: memref<32x32xf32, #tpu.memory_space<vmem>>, %arg21: memref<32x32xf32, #tpu.memory_space<vmem>>, %arg22: memref<40x32xf32, #tpu.memory_space<vmem>>, %arg23: memref<40x40xf32, #tpu.memory_space<vmem>>, %arg24: memref<1x8x32xf32, #tpu.memory_space<vmem>>, %arg25: memref<1x4x8x10xf32, #tpu.memory_space<vmem>>) attributes {dimension_semantics = [#tpu.dimension_semantics<parallel>], iteration_bounds = array<i64: 2>, scalar_prefetch = 0 : i64, scratch_operands = 0 : i64, tpu.core_type = #tpu.core_type<tc>, window_params = [{transform_indices = @transform_0, window_bounds = array<i64: 1, 8, 32>}, {transform_indices = @transform_1, window_bounds = array<i64: 1, 10, 32>}, {transform_indices = @transform_2, window_bounds = array<i64: 1, 8, 8>}, {transform_indices = @transform_3, window_bounds = array<i64: 1, 1, 10>}, {pipeline_mode = #tpu.pipeline_mode<synchronous>, transform_indices = @transform_4, window_bounds = array<i64: 32, 96>}, {pipeline_mode = #tpu.pipeline_mode<synchronous>, transform_indices = @transform_5, window_bounds = array<i64: 1, 96>}, {pipeline_mode = #tpu.pipeline_mode<synchronous>, transform_indices = @transform_6, window_bounds = array<i64: 32, 32>}, {pipeline_mode = #tpu.pipeline_mode<synchronous>, transform_indices = @transform_7, window_bounds = array<i64: 1, 32>}, {pipeline_mode = #tpu.pipeline_mode<synchronous>, transform_indices = @transform_8, window_bounds = array<i64: 32, 32>}, {pipeline_mode = #tpu.pipeline_mode<synchronous>, transform_indices = @transform_9, window_bounds = array<i64: 1, 32>}, {pipeline_mode = #tpu.pipeline_mode<synchronous>, transform_indices = @transform_10, window_bounds = array<i64: 32, 64>}, {pipeline_mode = #tpu.pipeline_mode<synchronous>, transform_indices = @transform_11, window_bounds = array<i64: 1, 64>}, {pipeline_mode = #tpu.pipeline_mode<synchronous>, transform_indices = @transform_12, window_bounds = array<i64: 32, 32>}, {pipeline_mode = #tpu.pipeline_mode<synchronous>, transform_indices = @transform_13, window_bounds = array<i64: 1, 32>}, {pipeline_mode = #tpu.pipeline_mode<synchronous>, transform_indices = @transform_14, window_bounds = array<i64: 32, 64>}, {pipeline_mode = #tpu.pipeline_mode<synchronous>, transform_indices = @transform_15, window_bounds = array<i64: 1, 64>}, {pipeline_mode = #tpu.pipeline_mode<synchronous>, transform_indices = @transform_16, window_bounds = array<i64: 64, 32>}, {pipeline_mode = #tpu.pipeline_mode<synchronous>, transform_indices = @transform_17, window_bounds = array<i64: 1, 32>}, {pipeline_mode = #tpu.pipeline_mode<synchronous>, transform_indices = @transform_18, window_bounds = array<i64: 6, 32>}, {pipeline_mode = #tpu.pipeline_mode<synchronous>, transform_indices = @transform_19, window_bounds = array<i64: 32, 32>}, {pipeline_mode = #tpu.pipeline_mode<synchronous>, transform_indices = @transform_20, window_bounds = array<i64: 32, 32>}, {pipeline_mode = #tpu.pipeline_mode<synchronous>, transform_indices = @transform_21, window_bounds = array<i64: 40, 32>}, {pipeline_mode = #tpu.pipeline_mode<synchronous>, transform_indices = @transform_22, window_bounds = array<i64: 40, 40>}, {transform_indices = @transform_23, window_bounds = array<i64: 1, 8, 32>}, {transform_indices = @transform_24, window_bounds = array<i64: 1, 4, 8, 10>}]} {
    %c0 = arith.constant 0 : index
    %c0_0 = arith.constant 0 : index
    %c0_1 = arith.constant 0 : index
    %0 = vector.load %arg1[%c0, %c0_0, %c0_1] : memref<1x8x32xf32, #tpu.memory_space<vmem>>, vector<1x8x32xf32>
    %1 = vector.shape_cast %0 : vector<1x8x32xf32> to vector<8x32xf32>
    %c0_2 = arith.constant 0 : index
    %c0_3 = arith.constant 0 : index
    %c0_4 = arith.constant 0 : index
    %2 = vector.load %arg2[%c0_2, %c0_3, %c0_4] : memref<1x10x32xf32, #tpu.memory_space<vmem>>, vector<1x10x32xf32>
    %3 = vector.shape_cast %2 : vector<1x10x32xf32> to vector<10x32xf32>
    %c0_5 = arith.constant 0 : index
    %c0_6 = arith.constant 0 : index
    %4 = vector.load %arg19[%c0_5, %c0_6] : memref<6x32xf32, #tpu.memory_space<vmem>>, vector<6x32xf32>
    %c0_7 = arith.constant 0 : index
    %c0_8 = arith.constant 0 : index
    %c0_9 = arith.constant 0 : index
    %5 = vector.load %arg3[%c0_7, %c0_8, %c0_9] : memref<1x8x8xi32, #tpu.memory_space<vmem>>, vector<1x8x8xi32>
    %6 = vector.shape_cast %5 : vector<1x8x8xi32> to vector<8x8xi32>
    %c0_i32 = arith.constant 0 : i32
    %7 = vector.broadcast %c0_i32 : i32 to vector<8x8xi32>
    %8 = arith.cmpi eq, %6, %7 : vector<8x8xi32>
    %cst = arith.constant -1.000000e+10 : f32
    %cst_10 = arith.constant 0.000000e+00 : f32
    %9 = vector.broadcast %cst : f32 to vector<8x8xf32>
    %10 = vector.broadcast %cst_10 : f32 to vector<8x8xf32>
    %11 = arith.select %8, %9, %10 : vector<8x8xi1>, vector<8x8xf32>
    %12 = tpu.concatenate %11, %11, %11, %11 in 1 : vector<8x8xf32>, vector<8x8xf32>, vector<8x8xf32>, vector<8x8xf32> -> vector<8x32xf32>
    %c0_11 = arith.constant 0 : index
    %c0_12 = arith.constant 0 : index
    %c0_13 = arith.constant 0 : index
    %13 = vector.load %arg4[%c0_11, %c0_12, %c0_13] : memref<1x1x10xi32, #tpu.memory_space<vmem>>, vector<1x1x10xi32>
    %14 = vector.shape_cast %13 : vector<1x1x10xi32> to vector<1x10xi32>
    %c0_i32_14 = arith.constant 0 : i32
    %15 = vector.broadcast %c0_i32_14 : i32 to vector<1x10xi32>
    %16 = arith.cmpi eq, %14, %15 : vector<1x10xi32>
    %cst_15 = arith.constant -1.000000e+10 : f32
    %cst_16 = arith.constant 0.000000e+00 : f32
    %17 = vector.broadcast %cst_15 : f32 to vector<1x10xf32>
    %18 = vector.broadcast %cst_16 : f32 to vector<1x10xf32>
    %19 = arith.select %16, %17, %18 : vector<1x10xi1>, vector<1x10xf32>
    %20 = tpu.concatenate %19, %19, %19, %19 in 1 : vector<1x10xf32>, vector<1x10xf32>, vector<1x10xf32>, vector<1x10xf32> -> vector<1x40xf32>
    %c0_17 = arith.constant 0 : index
    %c0_18 = arith.constant 0 : index
    %21 = vector.load %arg5[%c0_17, %c0_18] : memref<32x96xf32, #tpu.memory_space<vmem>>, vector<32x96xf32>
    %cst_19 = arith.constant dense<0.000000e+00> : vector<8x96xf32>
    %22 = tpu.matmul %1, %21, %cst_19 {dimension_numbers = #tpu.dot_dimension_numbers<[1], [0], [0], [1], [0, 0, 1, 1], [], []>} : vector<8x32xf32>, vector<32x96xf32>, vector<8x96xf32> -> vector<8x96xf32>
    %c0_20 = arith.constant 0 : index
    %c0_21 = arith.constant 0 : index
    %23 = vector.load %arg6[%c0_20, %c0_21] : memref<1x96xf32, #tpu.memory_space<vmem>>, vector<1x96xf32>
    %24 = vector.broadcast %23 : vector<1x96xf32> to vector<8x96xf32>
    %25 = arith.addf %22, %24 : vector<8x96xf32>
    %26 = vector.extract_strided_slice %25 {offsets = [0, 0], sizes = [8, 32], strides = [1, 1]} : vector<8x96xf32> to vector<8x32xf32>
    %cst_22 = arith.constant 0.353553385 : f32
    %27 = vector.broadcast %cst_22 : f32 to vector<8x32xf32>
    %28 = arith.mulf %26, %27 : vector<8x32xf32>
    %29 = vector.extract_strided_slice %25 {offsets = [0, 32], sizes = [8, 32], strides = [1, 1]} : vector<8x96xf32> to vector<8x32xf32>
    %30 = vector.extract_strided_slice %25 {offsets = [0, 64], sizes = [8, 32], strides = [1, 1]} : vector<8x96xf32> to vector<8x32xf32>
    %c0_23 = arith.constant 0 : index
    %c0_24 = arith.constant 0 : index
    %31 = vector.load %arg20[%c0_23, %c0_24] : memref<32x32xf32, #tpu.memory_space<vmem>>, vector<32x32xf32>
    %c0_25 = arith.constant 0 : index
    %c0_26 = arith.constant 0 : index
    %32 = vector.load %arg21[%c0_25, %c0_26] : memref<32x32xf32, #tpu.memory_space<vmem>>, vector<32x32xf32>
    %c0_27 = arith.constant 0 : index
    %c0_28 = arith.constant 0 : index
    %33 = vector.load %arg7[%c0_27, %c0_28] : memref<32x32xf32, #tpu.memory_space<vmem>>, vector<32x32xf32>
    %c0_29 = arith.constant 0 : index
    %c0_30 = arith.constant 0 : index
    %34 = vector.load %arg8[%c0_29, %c0_30] : memref<1x32xf32, #tpu.memory_space<vmem>>, vector<1x32xf32>
    %35 = tpu.concatenate %29, %29, %29, %29 in 0 : vector<8x32xf32>, vector<8x32xf32>, vector<8x32xf32>, vector<8x32xf32> -> vector<32x32xf32>
    %36 = arith.mulf %35, %31 : vector<32x32xf32>
    %37 = tpu.concatenate %30, %30, %30, %30 in 0 : vector<8x32xf32>, vector<8x32xf32>, vector<8x32xf32>, vector<8x32xf32> -> vector<32x32xf32>
    %38 = arith.mulf %37, %31 : vector<32x32xf32>
    %cst_31 = arith.constant dense<0.000000e+00> : vector<8x32xf32>
    %39 = tpu.matmul %28, %36, %cst_31 {dimension_numbers = #tpu.dot_dimension_numbers<[1], [1], [0], [0], [0, 0, 1, 0], [], []>} : vector<8x32xf32>, vector<32x32xf32>, vector<8x32xf32> -> vector<8x32xf32>
    %40 = arith.addf %39, %12 : vector<8x32xf32>
    %cst_32 = arith.constant dense<0xFF800000> : vector<8xf32>
    %41 = vector.multi_reduction <maximumf>, %40, %cst_32 [1] : vector<8x32xf32> to vector<8xf32>
    %42 = vector.shape_cast %41 : vector<8xf32> to vector<8x1xf32>
    %43 = vector.broadcast %42 : vector<8x1xf32> to vector<8x32xf32>
    %44 = arith.subf %40, %43 : vector<8x32xf32>
    %45 = math.exp %44 : vector<8x32xf32>
    %cst_33 = arith.constant dense<0.000000e+00> : vector<8x32xf32>
    %46 = tpu.matmul %45, %32, %cst_33 {dimension_numbers = #tpu.dot_dimension_numbers<[1], [0], [0], [1], [0, 0, 1, 1], [], []>} : vector<8x32xf32>, vector<32x32xf32>, vector<8x32xf32> -> vector<8x32xf32>
    %47 = tpu.reciprocal %46 : vector<8x32xf32> -> vector<8x32xf32>
    %48 = arith.mulf %45, %47 : vector<8x32xf32>
    %cst_34 = arith.constant dense<0.000000e+00> : vector<8x32xf32>
    %49 = tpu.matmul %48, %38, %cst_34 {dimension_numbers = #tpu.dot_dimension_numbers<[1], [0], [0], [1], [0, 0, 1, 1], [], []>} : vector<8x32xf32>, vector<32x32xf32>, vector<8x32xf32> -> vector<8x32xf32>
    %cst_35 = arith.constant dense<0.000000e+00> : vector<8x32xf32>
    %50 = tpu.matmul %49, %33, %cst_35 {dimension_numbers = #tpu.dot_dimension_numbers<[1], [0], [0], [1], [0, 0, 1, 1], [], []>} : vector<8x32xf32>, vector<32x32xf32>, vector<8x32xf32> -> vector<8x32xf32>
    %51 = vector.broadcast %34 : vector<1x32xf32> to vector<8x32xf32>
    %52 = arith.addf %50, %51 : vector<8x32xf32>
    %53 = arith.addf %1, %52 : vector<8x32xf32>
    %54 = vector.extract_strided_slice %4 {offsets = [0, 0], sizes = [1, 32], strides = [1, 1]} : vector<6x32xf32> to vector<1x32xf32>
    %55 = vector.extract_strided_slice %4 {offsets = [1, 0], sizes = [1, 32], strides = [1, 1]} : vector<6x32xf32> to vector<1x32xf32>
    %cst_36 = arith.constant dense<0.000000e+00> : vector<8xf32>
    %56 = vector.multi_reduction <add>, %53, %cst_36 [1] : vector<8x32xf32> to vector<8xf32>
    %57 = vector.shape_cast %56 : vector<8xf32> to vector<8x1xf32>
    %cst_37 = arith.constant 3.200000e+01 : f32
    %58 = vector.broadcast %cst_37 : f32 to vector<8x1xf32>
    %59 = arith.divf %57, %58 : vector<8x1xf32>
    %60 = vector.broadcast %59 : vector<8x1xf32> to vector<8x32xf32>
    %61 = arith.subf %53, %60 : vector<8x32xf32>
    %62 = arith.mulf %61, %61 : vector<8x32xf32>
    %cst_38 = arith.constant dense<0.000000e+00> : vector<8xf32>
    %63 = vector.multi_reduction <add>, %62, %cst_38 [1] : vector<8x32xf32> to vector<8xf32>
    %64 = vector.shape_cast %63 : vector<8xf32> to vector<8x1xf32>
    %cst_39 = arith.constant 3.200000e+01 : f32
    %65 = vector.broadcast %cst_39 : f32 to vector<8x1xf32>
    %66 = arith.divf %64, %65 : vector<8x1xf32>
    %67 = vector.broadcast %59 : vector<8x1xf32> to vector<8x32xf32>
    %68 = arith.subf %53, %67 : vector<8x32xf32>
    %cst_40 = arith.constant 9.99999974E-6 : f32
    %69 = vector.broadcast %cst_40 : f32 to vector<8x1xf32>
    %70 = arith.addf %66, %69 : vector<8x1xf32>
    %71 = math.rsqrt %70 : vector<8x1xf32>
    %72 = vector.broadcast %71 : vector<8x1xf32> to vector<8x32xf32>
    %73 = arith.mulf %68, %72 : vector<8x32xf32>
    %74 = vector.broadcast %54 : vector<1x32xf32> to vector<8x32xf32>
    %75 = arith.mulf %73, %74 : vector<8x32xf32>
    %76 = vector.broadcast %55 : vector<1x32xf32> to vector<8x32xf32>
    %77 = arith.addf %75, %76 : vector<8x32xf32>
    %c0_41 = arith.constant 0 : index
    %c0_42 = arith.constant 0 : index
    %78 = vector.load %arg9[%c0_41, %c0_42] : memref<32x32xf32, #tpu.memory_space<vmem>>, vector<32x32xf32>
    %cst_43 = arith.constant dense<0.000000e+00> : vector<8x32xf32>
    %79 = tpu.matmul %77, %78, %cst_43 {dimension_numbers = #tpu.dot_dimension_numbers<[1], [0], [0], [1], [0, 0, 1, 1], [], []>} : vector<8x32xf32>, vector<32x32xf32>, vector<8x32xf32> -> vector<8x32xf32>
    %c0_44 = arith.constant 0 : index
    %c0_45 = arith.constant 0 : index
    %80 = vector.load %arg10[%c0_44, %c0_45] : memref<1x32xf32, #tpu.memory_space<vmem>>, vector<1x32xf32>
    %81 = vector.broadcast %80 : vector<1x32xf32> to vector<8x32xf32>
    %82 = arith.addf %79, %81 : vector<8x32xf32>
    %cst_46 = arith.constant 0.353553385 : f32
    %83 = vector.broadcast %cst_46 : f32 to vector<8x32xf32>
    %84 = arith.mulf %82, %83 : vector<8x32xf32>
    %c0_47 = arith.constant 0 : index
    %c0_48 = arith.constant 0 : index
    %85 = vector.load %arg11[%c0_47, %c0_48] : memref<32x64xf32, #tpu.memory_space<vmem>>, vector<32x64xf32>
    %cst_49 = arith.constant dense<0.000000e+00> : vector<10x64xf32>
    %86 = tpu.matmul %3, %85, %cst_49 {dimension_numbers = #tpu.dot_dimension_numbers<[1], [0], [0], [1], [0, 0, 1, 1], [], []>} : vector<10x32xf32>, vector<32x64xf32>, vector<10x64xf32> -> vector<10x64xf32>
    %c0_50 = arith.constant 0 : index
    %c0_51 = arith.constant 0 : index
    %87 = vector.load %arg12[%c0_50, %c0_51] : memref<1x64xf32, #tpu.memory_space<vmem>>, vector<1x64xf32>
    %88 = vector.broadcast %87 : vector<1x64xf32> to vector<10x64xf32>
    %89 = arith.addf %86, %88 : vector<10x64xf32>
    %90 = vector.extract_strided_slice %89 {offsets = [0, 0], sizes = [10, 32], strides = [1, 1]} : vector<10x64xf32> to vector<10x32xf32>
    %91 = vector.extract_strided_slice %89 {offsets = [0, 32], sizes = [10, 32], strides = [1, 1]} : vector<10x64xf32> to vector<10x32xf32>
    %c0_52 = arith.constant 0 : index
    %c0_53 = arith.constant 0 : index
    %92 = vector.load %arg22[%c0_52, %c0_53] : memref<40x32xf32, #tpu.memory_space<vmem>>, vector<40x32xf32>
    %c0_54 = arith.constant 0 : index
    %c0_55 = arith.constant 0 : index
    %93 = vector.load %arg23[%c0_54, %c0_55] : memref<40x40xf32, #tpu.memory_space<vmem>>, vector<40x40xf32>
    %c0_56 = arith.constant 0 : index
    %c0_57 = arith.constant 0 : index
    %94 = vector.load %arg13[%c0_56, %c0_57] : memref<32x32xf32, #tpu.memory_space<vmem>>, vector<32x32xf32>
    %c0_58 = arith.constant 0 : index
    %c0_59 = arith.constant 0 : index
    %95 = vector.load %arg14[%c0_58, %c0_59] : memref<1x32xf32, #tpu.memory_space<vmem>>, vector<1x32xf32>
    %96 = tpu.concatenate %90, %90, %90, %90 in 0 : vector<10x32xf32>, vector<10x32xf32>, vector<10x32xf32>, vector<10x32xf32> -> vector<40x32xf32>
    %97 = arith.mulf %96, %92 : vector<40x32xf32>
    %98 = tpu.concatenate %91, %91, %91, %91 in 0 : vector<10x32xf32>, vector<10x32xf32>, vector<10x32xf32>, vector<10x32xf32> -> vector<40x32xf32>
    %99 = arith.mulf %98, %92 : vector<40x32xf32>
    %cst_60 = arith.constant dense<0.000000e+00> : vector<8x40xf32>
    %100 = tpu.matmul %84, %97, %cst_60 {dimension_numbers = #tpu.dot_dimension_numbers<[1], [1], [0], [0], [0, 0, 1, 0], [], []>} : vector<8x32xf32>, vector<40x32xf32>, vector<8x40xf32> -> vector<8x40xf32>
    %101 = vector.broadcast %20 : vector<1x40xf32> to vector<8x40xf32>
    %102 = arith.addf %100, %101 : vector<8x40xf32>
    %cst_61 = arith.constant dense<0xFF800000> : vector<8xf32>
    %103 = vector.multi_reduction <maximumf>, %102, %cst_61 [1] : vector<8x40xf32> to vector<8xf32>
    %104 = vector.shape_cast %103 : vector<8xf32> to vector<8x1xf32>
    %105 = vector.broadcast %104 : vector<8x1xf32> to vector<8x40xf32>
    %106 = arith.subf %102, %105 : vector<8x40xf32>
    %107 = math.exp %106 : vector<8x40xf32>
    %cst_62 = arith.constant dense<0.000000e+00> : vector<8x40xf32>
    %108 = tpu.matmul %107, %93, %cst_62 {dimension_numbers = #tpu.dot_dimension_numbers<[1], [0], [0], [1], [0, 0, 1, 1], [], []>} : vector<8x40xf32>, vector<40x40xf32>, vector<8x40xf32> -> vector<8x40xf32>
    %109 = tpu.reciprocal %108 : vector<8x40xf32> -> vector<8x40xf32>
    %110 = arith.mulf %107, %109 : vector<8x40xf32>
    %cst_63 = arith.constant dense<0.000000e+00> : vector<8x32xf32>
    %111 = tpu.matmul %110, %99, %cst_63 {dimension_numbers = #tpu.dot_dimension_numbers<[1], [0], [0], [1], [0, 0, 1, 1], [], []>} : vector<8x40xf32>, vector<40x32xf32>, vector<8x32xf32> -> vector<8x32xf32>
    %cst_64 = arith.constant dense<0.000000e+00> : vector<8x32xf32>
    %112 = tpu.matmul %111, %94, %cst_64 {dimension_numbers = #tpu.dot_dimension_numbers<[1], [0], [0], [1], [0, 0, 1, 1], [], []>} : vector<8x32xf32>, vector<32x32xf32>, vector<8x32xf32> -> vector<8x32xf32>
    %113 = vector.broadcast %95 : vector<1x32xf32> to vector<8x32xf32>
    %114 = arith.addf %112, %113 : vector<8x32xf32>
    %115 = arith.addf %77, %114 : vector<8x32xf32>
    %116 = vector.extract_strided_slice %4 {offsets = [2, 0], sizes = [1, 32], strides = [1, 1]} : vector<6x32xf32> to vector<1x32xf32>
    %117 = vector.extract_strided_slice %4 {offsets = [3, 0], sizes = [1, 32], strides = [1, 1]} : vector<6x32xf32> to vector<1x32xf32>
    %cst_65 = arith.constant dense<0.000000e+00> : vector<8xf32>
    %118 = vector.multi_reduction <add>, %115, %cst_65 [1] : vector<8x32xf32> to vector<8xf32>
    %119 = vector.shape_cast %118 : vector<8xf32> to vector<8x1xf32>
    %cst_66 = arith.constant 3.200000e+01 : f32
    %120 = vector.broadcast %cst_66 : f32 to vector<8x1xf32>
    %121 = arith.divf %119, %120 : vector<8x1xf32>
    %122 = vector.broadcast %121 : vector<8x1xf32> to vector<8x32xf32>
    %123 = arith.subf %115, %122 : vector<8x32xf32>
    %124 = arith.mulf %123, %123 : vector<8x32xf32>
    %cst_67 = arith.constant dense<0.000000e+00> : vector<8xf32>
    %125 = vector.multi_reduction <add>, %124, %cst_67 [1] : vector<8x32xf32> to vector<8xf32>
    %126 = vector.shape_cast %125 : vector<8xf32> to vector<8x1xf32>
    %cst_68 = arith.constant 3.200000e+01 : f32
    %127 = vector.broadcast %cst_68 : f32 to vector<8x1xf32>
    %128 = arith.divf %126, %127 : vector<8x1xf32>
    %129 = vector.broadcast %121 : vector<8x1xf32> to vector<8x32xf32>
    %130 = arith.subf %115, %129 : vector<8x32xf32>
    %cst_69 = arith.constant 9.99999974E-6 : f32
    %131 = vector.broadcast %cst_69 : f32 to vector<8x1xf32>
    %132 = arith.addf %128, %131 : vector<8x1xf32>
    %133 = math.rsqrt %132 : vector<8x1xf32>
    %134 = vector.broadcast %133 : vector<8x1xf32> to vector<8x32xf32>
    %135 = arith.mulf %130, %134 : vector<8x32xf32>
    %136 = vector.broadcast %116 : vector<1x32xf32> to vector<8x32xf32>
    %137 = arith.mulf %135, %136 : vector<8x32xf32>
    %138 = vector.broadcast %117 : vector<1x32xf32> to vector<8x32xf32>
    %139 = arith.addf %137, %138 : vector<8x32xf32>
    %c0_70 = arith.constant 0 : index
    %c0_71 = arith.constant 0 : index
    %140 = vector.load %arg15[%c0_70, %c0_71] : memref<32x64xf32, #tpu.memory_space<vmem>>, vector<32x64xf32>
    %cst_72 = arith.constant dense<0.000000e+00> : vector<8x64xf32>
    %141 = tpu.matmul %139, %140, %cst_72 {dimension_numbers = #tpu.dot_dimension_numbers<[1], [0], [0], [1], [0, 0, 1, 1], [], []>} : vector<8x32xf32>, vector<32x64xf32>, vector<8x64xf32> -> vector<8x64xf32>
    %c0_73 = arith.constant 0 : index
    %c0_74 = arith.constant 0 : index
    %142 = vector.load %arg16[%c0_73, %c0_74] : memref<1x64xf32, #tpu.memory_space<vmem>>, vector<1x64xf32>
    %143 = vector.broadcast %142 : vector<1x64xf32> to vector<8x64xf32>
    %144 = arith.addf %141, %143 : vector<8x64xf32>
    %cst_75 = arith.constant 0.000000e+00 : f32
    %145 = vector.broadcast %cst_75 : f32 to vector<8x64xf32>
    %146 = arith.maximumf %144, %145 : vector<8x64xf32>
    %c0_76 = arith.constant 0 : index
    %c0_77 = arith.constant 0 : index
    %147 = vector.load %arg17[%c0_76, %c0_77] : memref<64x32xf32, #tpu.memory_space<vmem>>, vector<64x32xf32>
    %cst_78 = arith.constant dense<0.000000e+00> : vector<8x32xf32>
    %148 = tpu.matmul %146, %147, %cst_78 {dimension_numbers = #tpu.dot_dimension_numbers<[1], [0], [0], [1], [0, 0, 1, 1], [], []>} : vector<8x64xf32>, vector<64x32xf32>, vector<8x32xf32> -> vector<8x32xf32>
    %c0_79 = arith.constant 0 : index
    %c0_80 = arith.constant 0 : index
    %149 = vector.load %arg18[%c0_79, %c0_80] : memref<1x32xf32, #tpu.memory_space<vmem>>, vector<1x32xf32>
    %150 = vector.broadcast %149 : vector<1x32xf32> to vector<8x32xf32>
    %151 = arith.addf %148, %150 : vector<8x32xf32>
    %152 = arith.addf %139, %151 : vector<8x32xf32>
    %153 = vector.extract_strided_slice %4 {offsets = [4, 0], sizes = [1, 32], strides = [1, 1]} : vector<6x32xf32> to vector<1x32xf32>
    %154 = vector.extract_strided_slice %4 {offsets = [5, 0], sizes = [1, 32], strides = [1, 1]} : vector<6x32xf32> to vector<1x32xf32>
    %cst_81 = arith.constant dense<0.000000e+00> : vector<8xf32>
    %155 = vector.multi_reduction <add>, %152, %cst_81 [1] : vector<8x32xf32> to vector<8xf32>
    %156 = vector.shape_cast %155 : vector<8xf32> to vector<8x1xf32>
    %cst_82 = arith.constant 3.200000e+01 : f32
    %157 = vector.broadcast %cst_82 : f32 to vector<8x1xf32>
    %158 = arith.divf %156, %157 : vector<8x1xf32>
    %159 = vector.broadcast %158 : vector<8x1xf32> to vector<8x32xf32>
    %160 = arith.subf %152, %159 : vector<8x32xf32>
    %161 = arith.mulf %160, %160 : vector<8x32xf32>
    %cst_83 = arith.constant dense<0.000000e+00> : vector<8xf32>
    %162 = vector.multi_reduction <add>, %161, %cst_83 [1] : vector<8x32xf32> to vector<8xf32>
    %163 = vector.shape_cast %162 : vector<8xf32> to vector<8x1xf32>
    %cst_84 = arith.constant 3.200000e+01 : f32
    %164 = vector.broadcast %cst_84 : f32 to vector<8x1xf32>
    %165 = arith.divf %163, %164 : vector<8x1xf32>
    %166 = vector.broadcast %158 : vector<8x1xf32> to vector<8x32xf32>
    %167 = arith.subf %152, %166 : vector<8x32xf32>
    %cst_85 = arith.constant 9.99999974E-6 : f32
    %168 = vector.broadcast %cst_85 : f32 to vector<8x1xf32>
    %169 = arith.addf %165, %168 : vector<8x1xf32>
    %170 = math.rsqrt %169 : vector<8x1xf32>
    %171 = vector.broadcast %170 : vector<8x1xf32> to vector<8x32xf32>
    %172 = arith.mulf %167, %171 : vector<8x32xf32>
    %173 = vector.broadcast %153 : vector<1x32xf32> to vector<8x32xf32>
    %174 = arith.mulf %172, %173 : vector<8x32xf32>
    %175 = vector.broadcast %154 : vector<1x32xf32> to vector<8x32xf32>
    %176 = arith.addf %174, %175 : vector<8x32xf32>
    %c0_86 = arith.constant 0 : index
    %c0_87 = arith.constant 0 : index
    %c0_88 = arith.constant 0 : index
    %177 = vector.load %arg24[%c0_86, %c0_87, %c0_88] : memref<1x8x32xf32, #tpu.memory_space<vmem>>, vector<1x8x32xf32>
    %178 = vector.shape_cast %177 : vector<1x8x32xf32> to vector<8x32xf32>
    %179 = vector.shape_cast %176 : vector<8x32xf32> to vector<1x8x32xf32>
    tpu.vector_store %arg24[%c0_86, %c0_87, %c0_88], %179 {strides = array<i32>} : memref<1x8x32xf32, #tpu.memory_space<vmem>>, vector<1x8x32xf32>,
    %180 = vector.extract_strided_slice %110 {offsets = [0, 0], sizes = [8, 10], strides = [1, 1]} : vector<8x40xf32> to vector<8x10xf32>
    %c0_89 = arith.constant 0 : index
    %c0_90 = arith.constant 0 : index
    %c0_91 = arith.constant 0 : index
    %c0_92 = arith.constant 0 : index
    %181 = vector.load %arg25[%c0_89, %c0_90, %c0_91, %c0_92] : memref<1x4x8x10xf32, #tpu.memory_space<vmem>>, vector<1x1x8x10xf32>
    %182 = vector.shape_cast %181 : vector<1x1x8x10xf32> to vector<8x10xf32>
    %183 = vector.shape_cast %180 : vector<8x10xf32> to vector<1x1x8x10xf32>
    tpu.vector_store %arg25[%c0_89, %c0_90, %c0_91, %c0_92], %183 {strides = array<i32>} : memref<1x4x8x10xf32, #tpu.memory_space<vmem>>, vector<1x1x8x10xf32>,
    %184 = vector.extract_strided_slice %110 {offsets = [0, 10], sizes = [8, 10], strides = [1, 1]} : vector<8x40xf32> to vector<8x10xf32>
    %c0_93 = arith.constant 0 : index
    %c1 = arith.constant 1 : index
    %c0_94 = arith.constant 0 : index
    %c0_95 = arith.constant 0 : index
    %185 = vector.load %arg25[%c0_93, %c1, %c0_94, %c0_95] : memref<1x4x8x10xf32, #tpu.memory_space<vmem>>, vector<1x1x8x10xf32>
    %186 = vector.shape_cast %185 : vector<1x1x8x10xf32> to vector<8x10xf32>
    %187 = vector.shape_cast %184 : vector<8x10xf32> to vector<1x1x8x10xf32>
    tpu.vector_store %arg25[%c0_93, %c1, %c0_94, %c0_95], %187 {strides = array<i32>} : memref<1x4x8x10xf32, #tpu.memory_space<vmem>>, vector<1x1x8x10xf32>,
    %188 = vector.extract_strided_slice %110 {offsets = [0, 20], sizes = [8, 10], strides = [1, 1]} : vector<8x40xf32> to vector<8x10xf32>
    %c0_96 = arith.constant 0 : index
    %c2 = arith.constant 2 : index
    %c0_97 = arith.constant 0 : index
    %c0_98 = arith.constant 0 : index
    %189 = vector.load %arg25[%c0_96, %c2, %c0_97, %c0_98] : memref<1x4x8x10xf32, #tpu.memory_space<vmem>>, vector<1x1x8x10xf32>
    %190 = vector.shape_cast %189 : vector<1x1x8x10xf32> to vector<8x10xf32>
    %191 = vector.shape_cast %188 : vector<8x10xf32> to vector<1x1x8x10xf32>
    tpu.vector_store %arg25[%c0_96, %c2, %c0_97, %c0_98], %191 {strides = array<i32>} : memref<1x4x8x10xf32, #tpu.memory_space<vmem>>, vector<1x1x8x10xf32>,
    %192 = vector.extract_strided_slice %110 {offsets = [0, 30], sizes = [8, 10], strides = [1, 1]} : vector<8x40xf32> to vector<8x10xf32>
    %c0_99 = arith.constant 0 : index
    %c3 = arith.constant 3 : index
    %c0_100 = arith.constant 0 : index
    %c0_101 = arith.constant 0 : index
    %193 = vector.load %arg25[%c0_99, %c3, %c0_100, %c0_101] : memref<1x4x8x10xf32, #tpu.memory_space<vmem>>, vector<1x1x8x10xf32>
    %194 = vector.shape_cast %193 : vector<1x1x8x10xf32> to vector<8x10xf32>
    %195 = vector.shape_cast %192 : vector<8x10xf32> to vector<1x1x8x10xf32>
    tpu.vector_store %arg25[%c0_99, %c3, %c0_100, %c0_101], %195 {strides = array<i32>} : memref<1x4x8x10xf32, #tpu.memory_space<vmem>>, vector<1x1x8x10xf32>,
    return
  }
  func.func @transform_0(%arg0: i32) -> (i32, i32, i32) {
    %c0_i32 = arith.constant 0 : i32
    %c0_i32_0 = arith.constant 0 : i32
    %c0_i32_1 = arith.constant 0 : i32
    return %arg0, %c0_i32, %c0_i32_0 : i32, i32, i32
  }
  func.func @transform_1(%arg0: i32) -> (i32, i32, i32) {
    %c0_i32 = arith.constant 0 : i32
    %c0_i32_0 = arith.constant 0 : i32
    %c0_i32_1 = arith.constant 0 : i32
    return %arg0, %c0_i32, %c0_i32_0 : i32, i32, i32
  }
  func.func @transform_2(%arg0: i32) -> (i32, i32, i32) {
    %c0_i32 = arith.constant 0 : i32
    %c0_i32_0 = arith.constant 0 : i32
    %c0_i32_1 = arith.constant 0 : i32
    return %arg0, %c0_i32, %c0_i32_0 : i32, i32, i32
  }
  func.func @transform_3(%arg0: i32) -> (i32, i32, i32) {
    %c0_i32 = arith.constant 0 : i32
    %c0_i32_0 = arith.constant 0 : i32
    %c0_i32_1 = arith.constant 0 : i32
    return %arg0, %c0_i32, %c0_i32_0 : i32, i32, i32
  }
  func.func @transform_4(%arg0: i32) -> (i32, i32) {
    %c0_i32 = arith.constant 0 : i32
    %c0_i32_0 = arith.constant 0 : i32
    %c0_i32_1 = arith.constant 0 : i32
    return %c0_i32, %c0_i32_0 : i32, i32
  }
  func.func @transform_5(%arg0: i32) -> (i32, i32) {
    %c0_i32 = arith.constant 0 : i32
    %c0_i32_0 = arith.constant 0 : i32
    %c0_i32_1 = arith.constant 0 : i32
    return %c0_i32, %c0_i32_0 : i32, i32
  }
  func.func @transform_6(%arg0: i32) -> (i32, i32) {
    %c0_i32 = arith.constant 0 : i32
    %c0_i32_0 = arith.constant 0 : i32
    %c0_i32_1 = arith.constant 0 : i32
    return %c0_i32, %c0_i32_0 : i32, i32
  }
  func.func @transform_7(%arg0: i32) -> (i32, i32) {
    %c0_i32 = arith.constant 0 : i32
    %c0_i32_0 = arith.constant 0 : i32
    %c0_i32_1 = arith.constant 0 : i32
    return %c0_i32, %c0_i32_0 : i32, i32
  }
  func.func @transform_8(%arg0: i32) -> (i32, i32) {
    %c0_i32 = arith.constant 0 : i32
    %c0_i32_0 = arith.constant 0 : i32
    %c0_i32_1 = arith.constant 0 : i32
    return %c0_i32, %c0_i32_0 : i32, i32
  }
  func.func @transform_9(%arg0: i32) -> (i32, i32) {
    %c0_i32 = arith.constant 0 : i32
    %c0_i32_0 = arith.constant 0 : i32
    %c0_i32_1 = arith.constant 0 : i32
    return %c0_i32, %c0_i32_0 : i32, i32
  }
  func.func @transform_10(%arg0: i32) -> (i32, i32) {
    %c0_i32 = arith.constant 0 : i32
    %c0_i32_0 = arith.constant 0 : i32
    %c0_i32_1 = arith.constant 0 : i32
    return %c0_i32, %c0_i32_0 : i32, i32
  }
  func.func @transform_11(%arg0: i32) -> (i32, i32) {
    %c0_i32 = arith.constant 0 : i32
    %c0_i32_0 = arith.constant 0 : i32
    %c0_i32_1 = arith.constant 0 : i32
    return %c0_i32, %c0_i32_0 : i32, i32
  }
  func.func @transform_12(%arg0: i32) -> (i32, i32) {
    %c0_i32 = arith.constant 0 : i32
    %c0_i32_0 = arith.constant 0 : i32
    %c0_i32_1 = arith.constant 0 : i32
    return %c0_i32, %c0_i32_0 : i32, i32
  }
  func.func @transform_13(%arg0: i32) -> (i32, i32) {
    %c0_i32 = arith.constant 0 : i32
    %c0_i32_0 = arith.constant 0 : i32
    %c0_i32_1 = arith.constant 0 : i32
    return %c0_i32, %c0_i32_0 : i32, i32
  }
  func.func @transform_14(%arg0: i32) -> (i32, i32) {
    %c0_i32 = arith.constant 0 : i32
    %c0_i32_0 = arith.constant 0 : i32
    %c0_i32_1 = arith.constant 0 : i32
    return %c0_i32, %c0_i32_0 : i32, i32
  }
  func.func @transform_15(%arg0: i32) -> (i32, i32) {
    %c0_i32 = arith.constant 0 : i32
    %c0_i32_0 = arith.constant 0 : i32
    %c0_i32_1 = arith.constant 0 : i32
    return %c0_i32, %c0_i32_0 : i32, i32
  }
  func.func @transform_16(%arg0: i32) -> (i32, i32) {
    %c0_i32 = arith.constant 0 : i32
    %c0_i32_0 = arith.constant 0 : i32
    %c0_i32_1 = arith.constant 0 : i32
    return %c0_i32, %c0_i32_0 : i32, i32
  }
  func.func @transform_17(%arg0: i32) -> (i32, i32) {
    %c0_i32 = arith.constant 0 : i32
    %c0_i32_0 = arith.constant 0 : i32
    %c0_i32_1 = arith.constant 0 : i32
    return %c0_i32, %c0_i32_0 : i32, i32
  }
  func.func @transform_18(%arg0: i32) -> (i32, i32) {
    %c0_i32 = arith.constant 0 : i32
    %c0_i32_0 = arith.constant 0 : i32
    %c0_i32_1 = arith.constant 0 : i32
    return %c0_i32, %c0_i32_0 : i32, i32
  }
  func.func @transform_19(%arg0: i32) -> (i32, i32) {
    %c0_i32 = arith.constant 0 : i32
    %c0_i32_0 = arith.constant 0 : i32
    %c0_i32_1 = arith.constant 0 : i32
    return %c0_i32, %c0_i32_0 : i32, i32
  }
  func.func @transform_20(%arg0: i32) -> (i32, i32) {
    %c0_i32 = arith.constant 0 : i32
    %c0_i32_0 = arith.constant 0 : i32
    %c0_i32_1 = arith.constant 0 : i32
    return %c0_i32, %c0_i32_0 : i32, i32
  }
  func.func @transform_21(%arg0: i32) -> (i32, i32) {
    %c0_i32 = arith.constant 0 : i32
    %c0_i32_0 = arith.constant 0 : i32
    %c0_i32_1 = arith.constant 0 : i32
    return %c0_i32, %c0_i32_0 : i32, i32
  }
  func.func @transform_22(%arg0: i32) -> (i32, i32) {
    %c0_i32 = arith.constant 0 : i32
    %c0_i32_0 = arith.constant 0 : i32
    %c0_i32_1 = arith.constant 0 : i32
    return %c0_i32, %c0_i32_0 : i32, i32
  }
  func.func @transform_23(%arg0: i32) -> (i32, i32, i32) {
    %c0_i32 = arith.constant 0 : i32
    %c0_i32_0 = arith.constant 0 : i32
    %c0_i32_1 = arith.constant 0 : i32
    return %arg0, %c0_i32, %c0_i32_0 : i32, i32, i32
  }
  func.func @transform_24(%arg0: i32) -> (i32, i32, i32, i32) {
    %c0_i32 = arith.constant 0 : i32
    %c0_i32_0 = arith.constant 0 : i32
    %c0_i32_1 = arith.constant 0 : i32
    %c0_i32_2 = arith.constant 0 : i32
    return %arg0, %c0_i32, %c0_i32_0, %c0_i32_1 : i32, i32, i32, i32
  }
}

</mosaic_0001>

<llo_original>
// kernel: _decoder_layer_impl.1
$region0: #{_decoder_layer_impl.1}
  #allocation0 [shape = 'u32[]', space=smem, size = 0x4, offset = 0x4, fixed_abs, tag = 'smem constant byte address 0x4 - core index']
  #allocation1 [shape = 'u32[144,128]{1,0:T(1,128)}', space=vmem, size = 0x12000, scoped, tag = 'internal scratch']
  %s0 = inlined_call_operand.vmem [shape: f32[2,8,32], index: 0, kind: input, shape index: {}]
  %s1 = inlined_call_operand.vmem [shape: f32[2,10,32], index: 1, kind: input, shape index: {}]
  %s2 = inlined_call_operand.hbm [shape: s32[2,8,8], index: 2, kind: input, shape index: {}]
  %s3 = inlined_call_operand.hbm [shape: s32[2,1,10], index: 3, kind: input, shape index: {}]
  %s4 = inlined_call_operand.vmem [shape: f32[32,96], index: 4, kind: input, shape index: {}]
  %s5 = inlined_call_operand.vmem [shape: f32[1,96], index: 5, kind: input, shape index: {}]
  %s6 = inlined_call_operand.vmem [shape: f32[32,32], index: 6, kind: input, shape index: {}]
  %s7 = inlined_call_operand.vmem [shape: f32[1,32], index: 7, kind: input, shape index: {}]
  %s8 = inlined_call_operand.vmem [shape: f32[32,32], index: 8, kind: input, shape index: {}]
  %s9 = inlined_call_operand.vmem [shape: f32[1,32], index: 9, kind: input, shape index: {}]
  %s10 = inlined_call_operand.vmem [shape: f32[32,64], index: 10, kind: input, shape index: {}]
  %s11 = inlined_call_operand.vmem [shape: f32[1,64], index: 11, kind: input, shape index: {}]
  %s12 = inlined_call_operand.vmem [shape: f32[32,32], index: 12, kind: input, shape index: {}]
  %s13 = inlined_call_operand.vmem [shape: f32[1,32], index: 13, kind: input, shape index: {}]
  %s14 = inlined_call_operand.vmem [shape: f32[32,64], index: 14, kind: input, shape index: {}]
  %s15 = inlined_call_operand.vmem [shape: f32[1,64], index: 15, kind: input, shape index: {}]
  %s16 = inlined_call_operand.vmem [shape: f32[64,32], index: 16, kind: input, shape index: {}]
  %s17 = inlined_call_operand.vmem [shape: f32[1,32], index: 17, kind: input, shape index: {}]
  %s18 = inlined_call_operand.vmem [shape: f32[6,32], index: 18, kind: input, shape index: {}]
  %s19 = inlined_call_operand.vmem [shape: f32[32,32], index: 19, kind: input, shape index: {}, may-alias: {19,20}]
  %s20 = inlined_call_operand.vmem [shape: f32[32,32], index: 20, kind: input, shape index: {}, may-alias: {19,20}]
  %s21 = inlined_call_operand.vmem [shape: f32[40,32], index: 21, kind: input, shape index: {}]
  %s22 = inlined_call_operand.vmem [shape: f32[40,40], index: 22, kind: input, shape index: {}]
  %s23 = inlined_call_operand.hbm [shape: f32[2,8,32], index: 23, kind: output, shape index: {0}]
  %s24 = inlined_call_operand.hbm [shape: f32[2,4,8,10], index: 24, kind: output, shape index: {1}]
  %25 = xla_tuple %s23, %s24
  %s26 = sld [smem:[#allocation0]]
  $region141: #{_decoder_layer_impl.1} parent=0
    _
  %s28 = ssub.s32 1, %s26
  %s29 = scalar_select 0, %s28, %s26
  $region1: #{_decoder_layer_impl.1} parent=0
    #allocation2 [shape = 'u8[8192]{0}', space=vmem, size = 0x2000, scoped, tag = 'input window, operand 2']
    #allocation3 [shape = 's32[2]{0}', space=sflag, size = 0x8, scoped, tag = 'scoped memory for _decoder_layer_impl.1']
    #allocation4 [shape = 's32[2]{0}', space=sflag, size = 0x8, scoped, tag = 'scoped memory for _decoder_layer_impl.1']
    #allocation5 [shape = 'u8[1024]{0}', space=vmem, size = 0x400, scoped, tag = 'input window, operand 3']
    #allocation6 [shape = 's32[2]{0}', space=sflag, size = 0x8, scoped, tag = 'scoped memory for _decoder_layer_impl.1']
    #allocation7 [shape = 'u8[8192]{0}', space=vmem, size = 0x2000, scoped, tag = 'output window, operand 0']
    #allocation8 [shape = 'u8[32768]{0}', space=vmem, size = 0x8000, scoped, tag = 'output window, operand 1']
    #allocation9 [shape = 's32[2]{0}', space=sflag, size = 0x8, scoped, tag = 'scoped memory for _decoder_layer_impl.1']
    %30 = vsyncpa [#allocation3], 0
    %s31 = scalar_lea.sflag [#allocation3], 1
    %32 = vsyncpa %s31, 0
    %33 = vsyncpa [#allocation6], 0
    %s34 = scalar_lea.sflag [#allocation6], 1
    %35 = vsyncpa %s34, 0
    %36 = vsyncpa [#allocation4], 0
    %s37 = scalar_lea.sflag [#allocation4], 1
    %38 = vsyncpa %s37, 0
    %39 = vsyncpa [#allocation9], 0
    %s40 = scalar_lea.sflag [#allocation9], 1
    %41 = vsyncpa %s40, 0
    loop: start=0, step=1, limit=4
    $region2: #{_decoder_layer_impl.1} parent=1 // loop_pre_header
      _
    $region3: #{_decoder_layer_impl.1} parent=1 // loop_header
      %s43 = sphi 0, %s47
      %p44 = scmp.ge.s32.totalorder %s43, 4
      %s53 = sphi 0, %s55
      %s56 = sphi 0, %s53
      %s57 = sphi 0, %s56
      %s73 = sphi 0, %s57
      %s79 = sphi 0, %s81
      %s82 = sphi 0, %s79
      %s83 = sphi 0, %s82
      %s99 = sphi 0, %s83
      %s105 = sphi 0, %s107
      %s108 = sphi 0, %s105
      %s109 = sphi 0, %s108
      %s125 = sphi 0, %s109
      %s131 = sphi 0, %s133
      %s134 = sphi 0, %s131
      %s135 = sphi 0, %s134
      %s151 = sphi 0, %s135
      %s155 = sphi 0, %s155
      %s157 = sphi 0, %s155
      %s158 = sphi 0, %s157
      %s172 = sphi 0, %s158
      %s176 = sphi 0, %s176
      %s178 = sphi 0, %s176
      %s179 = sphi 0, %s178
      %s193 = sphi 0, %s179
      %s197 = sphi 0, %s197
      %s199 = sphi 0, %s197
      %s200 = sphi 0, %s199
      %s214 = sphi 0, %s200
      %s218 = sphi 0, %s218
      %s220 = sphi 0, %s218
      %s221 = sphi 0, %s220
      %s235 = sphi 0, %s221
      %s239 = sphi 0, %s239
      %s241 = sphi 0, %s239
      %s242 = sphi 0, %s241
      %s256 = sphi 0, %s242
      %s260 = sphi 0, %s260
      %s262 = sphi 0, %s260
      %s263 = sphi 0, %s262
      %s277 = sphi 0, %s263
      %s281 = sphi 0, %s281
      %s283 = sphi 0, %s281
      %s284 = sphi 0, %s283
      %s298 = sphi 0, %s284
      %s302 = sphi 0, %s302
      %s304 = sphi 0, %s302
      %s305 = sphi 0, %s304
      %s319 = sphi 0, %s305
      %s323 = sphi 0, %s323
      %s325 = sphi 0, %s323
      %s326 = sphi 0, %s325
      %s340 = sphi 0, %s326
      %s344 = sphi 0, %s344
      %s346 = sphi 0, %s344
      %s347 = sphi 0, %s346
      %s361 = sphi 0, %s347
      %s365 = sphi 0, %s365
      %s367 = sphi 0, %s365
      %s368 = sphi 0, %s367
      %s382 = sphi 0, %s368
      %s386 = sphi 0, %s386
      %s388 = sphi 0, %s386
      %s389 = sphi 0, %s388
      %s403 = sphi 0, %s389
      %s407 = sphi 0, %s407
      %s409 = sphi 0, %s407
      %s410 = sphi 0, %s409
      %s424 = sphi 0, %s410
      %s428 = sphi 0, %s428
      %s430 = sphi 0, %s428
      %s431 = sphi 0, %s430
      %s445 = sphi 0, %s431
      %s449 = sphi 0, %s449
      %s451 = sphi 0, %s449
      %s452 = sphi 0, %s451
      %s466 = sphi 0, %s452
      %s470 = sphi 0, %s470
      %s472 = sphi 0, %s470
      %s473 = sphi 0, %s472
      %s487 = sphi 0, %s473
      %s491 = sphi 0, %s491
      %s493 = sphi 0, %s491
      %s494 = sphi 0, %s493
      %s508 = sphi 0, %s494
      %s512 = sphi 0, %s512
      %s514 = sphi 0, %s512
      %s515 = sphi 0, %s514
      %s529 = sphi 0, %s515
      %s533 = sphi 0, %s533
      %s535 = sphi 0, %s533
      %s536 = sphi 0, %s535
      %s550 = sphi 0, %s536
      %s556 = sphi 0, %s558
      %s559 = sphi 0, %s556
      %s560 = sphi 0, %s559
      %s576 = sphi 0, %s560
      %s582 = sphi 0, %s584
      %s585 = sphi 0, %s582
      %s586 = sphi 0, %s585
      %s602 = sphi 0, %s586
    $region4: #{_decoder_layer_impl.1} parent=1 // loop_header_branch
      %46 = sbr.rel (%p44) target = $region8
    $region5: #{_decoder_layer_impl.1} parent=1 // loop_body
      %s48 = ssub.s32 %s43, 1
      %s49 = ssub.s32 %s43, 2
      %s50 = sadd.s32 %s43, 1
      %s51 = ssub.s32 %s43, %s50
      %p52 = scmp.eq.s32.totalorder %s51, 0
      %s54 = sadd.s32 %s53, 1
      %s55 = scalar_select %p52, %s53, %s54
      %p58 = pneg %p52
      %p59 = scmp.eq.s32.totalorder %s43, 1
      %p60 = por %p58, %p59
      %p61 = scmp.ne.s32.totalorder %s53, %s56
      %p62 = scmp.eq.s32.totalorder %s43, 0
      %p63 = por %p61, %p62
      %p64 = scmp.ne.s32.totalorder %s53, %s56
      %p65 = scmp.eq.s32.totalorder %s48, 1
      %p66 = por %p64, %p65
      %p67 = scmp.ne.s32.totalorder %s56, %s57
      %p68 = scmp.eq.s32.totalorder %s48, 0
      %p69 = por %p67, %p68
      %p70 = scmp.ne.s32.totalorder %s56, %s57
      %p71 = scmp.eq.s32.totalorder %s49, 1
      %p72 = por %p70, %p71
      %p74 = scmp.ne.s32.totalorder %s57, %s73
      %p75 = scmp.eq.s32.totalorder %s49, 0
      %p76 = por %p74, %p75
      %s77 = ssub.s32 %s43, %s50
      %p78 = scmp.eq.s32.totalorder %s77, 0
      %s80 = sadd.s32 %s79, 1
      %s81 = scalar_select %p78, %s79, %s80
      %p84 = pneg %p78
      %p85 = scmp.eq.s32.totalorder %s43, 1
      %p86 = por %p84, %p85
      %p87 = scmp.ne.s32.totalorder %s79, %s82
      %p88 = scmp.eq.s32.totalorder %s43, 0
      %p89 = por %p87, %p88
      %p90 = scmp.ne.s32.totalorder %s79, %s82
      %p91 = scmp.eq.s32.totalorder %s48, 1
      %p92 = por %p90, %p91
      %p93 = scmp.ne.s32.totalorder %s82, %s83
      %p94 = scmp.eq.s32.totalorder %s48, 0
      %p95 = por %p93, %p94
      %p96 = scmp.ne.s32.totalorder %s82, %s83
      %p97 = scmp.eq.s32.totalorder %s49, 1
      %p98 = por %p96, %p97
      %p100 = scmp.ne.s32.totalorder %s83, %s99
      %p101 = scmp.eq.s32.totalorder %s49, 0
      %p102 = por %p100, %p101
      %s103 = ssub.s32 %s43, %s50
      %p104 = scmp.eq.s32.totalorder %s103, 0
      %s106 = sadd.s32 %s105, 1
      %s107 = scalar_select %p104, %s105, %s106
      %p110 = pneg %p104
      %p111 = scmp.eq.s32.totalorder %s43, 1
      %p112 = por %p110, %p111
      %p113 = scmp.ne.s32.totalorder %s105, %s108
      %p114 = scmp.eq.s32.totalorder %s43, 0
      %p115 = por %p113, %p114
      %p116 = scmp.ne.s32.totalorder %s105, %s108
      %p117 = scmp.eq.s32.totalorder %s48, 1
      %p118 = por %p116, %p117
      %p119 = scmp.ne.s32.totalorder %s108, %s109
      %p120 = scmp.eq.s32.totalorder %s48, 0
      %p121 = por %p119, %p120
      %p122 = scmp.ne.s32.totalorder %s108, %s109
      %p123 = scmp.eq.s32.totalorder %s49, 1
      %p124 = por %p122, %p123
      %p126 = scmp.ne.s32.totalorder %s109, %s125
      %p127 = scmp.eq.s32.totalorder %s49, 0
      %p128 = por %p126, %p127
      %s129 = ssub.s32 %s43, %s50
      %p130 = scmp.eq.s32.totalorder %s129, 0
      %s132 = sadd.s32 %s131, 1
      %s133 = scalar_select %p130, %s131, %s132
      %p136 = pneg %p130
      %p137 = scmp.eq.s32.totalorder %s43, 1
      %p138 = por %p136, %p137
      %p139 = scmp.ne.s32.totalorder %s131, %s134
      %p140 = scmp.eq.s32.totalorder %s43, 0
      %p141 = por %p139, %p140
      %p142 = scmp.ne.s32.totalorder %s131, %s134
      %p143 = scmp.eq.s32.totalorder %s48, 1
      %p144 = por %p142, %p143
      %p145 = scmp.ne.s32.totalorder %s134, %s135
      %p146 = scmp.eq.s32.totalorder %s48, 0
      %p147 = por %p145, %p146
      %p148 = scmp.ne.s32.totalorder %s134, %s135
      %p149 = scmp.eq.s32.totalorder %s49, 1
      %p150 = por %p148, %p149
      %p152 = scmp.ne.s32.totalorder %s135, %s151
      %p153 = scmp.eq.s32.totalorder %s49, 0
      %p154 = por %p152, %p153
      %s156 = sadd.s32 %s155, 1
      %p159 = scmp.eq.s32.totalorder %s43, 1
      %p160 = scmp.ne.s32.totalorder %s155, %s157
      %p161 = scmp.eq.s32.totalorder %s43, 0
      %p162 = por %p160, %p161
      %p163 = scmp.ne.s32.totalorder %s155, %s157
      %p164 = scmp.eq.s32.totalorder %s48, 1
      %p165 = por %p163, %p164
      %p166 = scmp.ne.s32.totalorder %s157, %s158
      %p167 = scmp.eq.s32.totalorder %s48, 0
      %p168 = por %p166, %p167
      %p169 = scmp.ne.s32.totalorder %s157, %s158
      %p170 = scmp.eq.s32.totalorder %s49, 1
      %p171 = por %p169, %p170
      %p173 = scmp.ne.s32.totalorder %s158, %s172
      %p174 = scmp.eq.s32.totalorder %s49, 0
      %p175 = por %p173, %p174
      %s177 = sadd.s32 %s176, 1
      %p180 = scmp.eq.s32.totalorder %s43, 1
      %p181 = scmp.ne.s32.totalorder %s176, %s178
      %p182 = scmp.eq.s32.totalorder %s43, 0
      %p183 = por %p181, %p182
      %p184 = scmp.ne.s32.totalorder %s176, %s178
      %p185 = scmp.eq.s32.totalorder %s48, 1
      %p186 = por %p184, %p185
      %p187 = scmp.ne.s32.totalorder %s178, %s179
      %p188 = scmp.eq.s32.totalorder %s48, 0
      %p189 = por %p187, %p188
      %p190 = scmp.ne.s32.totalorder %s178, %s179
      %p191 = scmp.eq.s32.totalorder %s49, 1
      %p192 = por %p190, %p191
      %p194 = scmp.ne.s32.totalorder %s179, %s193
      %p195 = scmp.eq.s32.totalorder %s49, 0
      %p196 = por %p194, %p195
      %s198 = sadd.s32 %s197, 1
      %p201 = scmp.eq.s32.totalorder %s43, 1
      %p202 = scmp.ne.s32.totalorder %s197, %s199
      %p203 = scmp.eq.s32.totalorder %s43, 0
      %p204 = por %p202, %p203
      %p205 = scmp.ne.s32.totalorder %s197, %s199
      %p206 = scmp.eq.s32.totalorder %s48, 1
      %p207 = por %p205, %p206
      %p208 = scmp.ne.s32.totalorder %s199, %s200
      %p209 = scmp.eq.s32.totalorder %s48, 0
      %p210 = por %p208, %p209
      %p211 = scmp.ne.s32.totalorder %s199, %s200
      %p212 = scmp.eq.s32.totalorder %s49, 1
      %p213 = por %p211, %p212
      %p215 = scmp.ne.s32.totalorder %s200, %s214
      %p216 = scmp.eq.s32.totalorder %s49, 0
      %p217 = por %p215, %p216
      %s219 = sadd.s32 %s218, 1
      %p222 = scmp.eq.s32.totalorder %s43, 1
      %p223 = scmp.ne.s32.totalorder %s218, %s220
      %p224 = scmp.eq.s32.totalorder %s43, 0
      %p225 = por %p223, %p224
      %p226 = scmp.ne.s32.totalorder %s218, %s220
      %p227 = scmp.eq.s32.totalorder %s48, 1
      %p228 = por %p226, %p227
      %p229 = scmp.ne.s32.totalorder %s220, %s221
      %p230 = scmp.eq.s32.totalorder %s48, 0
      %p231 = por %p229, %p230
      %p232 = scmp.ne.s32.totalorder %s220, %s221
      %p233 = scmp.eq.s32.totalorder %s49, 1
      %p234 = por %p232, %p233
      %p236 = scmp.ne.s32.totalorder %s221, %s235
      %p237 = scmp.eq.s32.totalorder %s49, 0
      %p238 = por %p236, %p237
      %s240 = sadd.s32 %s239, 1
      %p243 = scmp.eq.s32.totalorder %s43, 1
      %p244 = scmp.ne.s32.totalorder %s239, %s241
      %p245 = scmp.eq.s32.totalorder %s43, 0
      %p246 = por %p244, %p245
      %p247 = scmp.ne.s32.totalorder %s239, %s241
      %p248 = scmp.eq.s32.totalorder %s48, 1
      %p249 = por %p247, %p248
      %p250 = scmp.ne.s32.totalorder %s241, %s242
      %p251 = scmp.eq.s32.totalorder %s48, 0
      %p252 = por %p250, %p251
      %p253 = scmp.ne.s32.totalorder %s241, %s242
      %p254 = scmp.eq.s32.totalorder %s49, 1
      %p255 = por %p253, %p254
      %p257 = scmp.ne.s32.totalorder %s242, %s256
      %p258 = scmp.eq.s32.totalorder %s49, 0
      %p259 = por %p257, %p258
      %s261 = sadd.s32 %s260, 1
      %p264 = scmp.eq.s32.totalorder %s43, 1
      %p265 = scmp.ne.s32.totalorder %s260, %s262
      %p266 = scmp.eq.s32.totalorder %s43, 0
      %p267 = por %p265, %p266
      %p268 = scmp.ne.s32.totalorder %s260, %s262
      %p269 = scmp.eq.s32.totalorder %s48, 1
      %p270 = por %p268, %p269
      %p271 = scmp.ne.s32.totalorder %s262, %s263
      %p272 = scmp.eq.s32.totalorder %s48, 0
      %p273 = por %p271, %p272
      %p274 = scmp.ne.s32.totalorder %s262, %s263
      %p275 = scmp.eq.s32.totalorder %s49, 1
      %p276 = por %p274, %p275
      %p278 = scmp.ne.s32.totalorder %s263, %s277
      %p279 = scmp.eq.s32.totalorder %s49, 0
      %p280 = por %p278, %p279
      %s282 = sadd.s32 %s281, 1
      %p285 = scmp.eq.s32.totalorder %s43, 1
      %p286 = scmp.ne.s32.totalorder %s281, %s283
      %p287 = scmp.eq.s32.totalorder %s43, 0
      %p288 = por %p286, %p287
      %p289 = scmp.ne.s32.totalorder %s281, %s283
      %p290 = scmp.eq.s32.totalorder %s48, 1
      %p291 = por %p289, %p290
      %p292 = scmp.ne.s32.totalorder %s283, %s284
      %p293 = scmp.eq.s32.totalorder %s48, 0
      %p294 = por %p292, %p293
      %p295 = scmp.ne.s32.totalorder %s283, %s284
      %p296 = scmp.eq.s32.totalorder %s49, 1
      %p297 = por %p295, %p296
      %p299 = scmp.ne.s32.totalorder %s284, %s298
      %p300 = scmp.eq.s32.totalorder %s49, 0
      %p301 = por %p299, %p300
      %s303 = sadd.s32 %s302, 1
      %p306 = scmp.eq.s32.totalorder %s43, 1
      %p307 = scmp.ne.s32.totalorder %s302, %s304
      %p308 = scmp.eq.s32.totalorder %s43, 0
      %p309 = por %p307, %p308
      %p310 = scmp.ne.s32.totalorder %s302, %s304
      %p311 = scmp.eq.s32.totalorder %s48, 1
      %p312 = por %p310, %p311
      %p313 = scmp.ne.s32.totalorder %s304, %s305
      %p314 = scmp.eq.s32.totalorder %s48, 0
      %p315 = por %p313, %p314
      %p316 = scmp.ne.s32.totalorder %s304, %s305
      %p317 = scmp.eq.s32.totalorder %s49, 1
      %p318 = por %p316, %p317
      %p320 = scmp.ne.s32.totalorder %s305, %s319
      %p321 = scmp.eq.s32.totalorder %s49, 0
      %p322 = por %p320, %p321
      %s324 = sadd.s32 %s323, 1
      %p327 = scmp.eq.s32.totalorder %s43, 1
      %p328 = scmp.ne.s32.totalorder %s323, %s325
      %p329 = scmp.eq.s32.totalorder %s43, 0
      %p330 = por %p328, %p329
      %p331 = scmp.ne.s32.totalorder %s323, %s325
      %p332 = scmp.eq.s32.totalorder %s48, 1
      %p333 = por %p331, %p332
      %p334 = scmp.ne.s32.totalorder %s325, %s326
      %p335 = scmp.eq.s32.totalorder %s48, 0
      %p336 = por %p334, %p335
      %p337 = scmp.ne.s32.totalorder %s325, %s326
      %p338 = scmp.eq.s32.totalorder %s49, 1
      %p339 = por %p337, %p338
      %p341 = scmp.ne.s32.totalorder %s326, %s340
      %p342 = scmp.eq.s32.totalorder %s49, 0
      %p343 = por %p341, %p342
      %s345 = sadd.s32 %s344, 1
      %p348 = scmp.eq.s32.totalorder %s43, 1
      %p349 = scmp.ne.s32.totalorder %s344, %s346
      %p350 = scmp.eq.s32.totalorder %s43, 0
      %p351 = por %p349, %p350
      %p352 = scmp.ne.s32.totalorder %s344, %s346
      %p353 = scmp.eq.s32.totalorder %s48, 1
      %p354 = por %p352, %p353
      %p355 = scmp.ne.s32.totalorder %s346, %s347
      %p356 = scmp.eq.s32.totalorder %s48, 0
      %p357 = por %p355, %p356
      %p358 = scmp.ne.s32.totalorder %s346, %s347
      %p359 = scmp.eq.s32.totalorder %s49, 1
      %p360 = por %p358, %p359
      %p362 = scmp.ne.s32.totalorder %s347, %s361
      %p363 = scmp.eq.s32.totalorder %s49, 0
      %p364 = por %p362, %p363
      %s366 = sadd.s32 %s365, 1
      %p369 = scmp.eq.s32.totalorder %s43, 1
      %p370 = scmp.ne.s32.totalorder %s365, %s367
      %p371 = scmp.eq.s32.totalorder %s43, 0
      %p372 = por %p370, %p371
      %p373 = scmp.ne.s32.totalorder %s365, %s367
      %p374 = scmp.eq.s32.totalorder %s48, 1
      %p375 = por %p373, %p374
      %p376 = scmp.ne.s32.totalorder %s367, %s368
      %p377 = scmp.eq.s32.totalorder %s48, 0
      %p378 = por %p376, %p377
      %p379 = scmp.ne.s32.totalorder %s367, %s368
      %p380 = scmp.eq.s32.totalorder %s49, 1
      %p381 = por %p379, %p380
      %p383 = scmp.ne.s32.totalorder %s368, %s382
      %p384 = scmp.eq.s32.totalorder %s49, 0
      %p385 = por %p383, %p384
      %s387 = sadd.s32 %s386, 1
      %p390 = scmp.eq.s32.totalorder %s43, 1
      %p391 = scmp.ne.s32.totalorder %s386, %s388
      %p392 = scmp.eq.s32.totalorder %s43, 0
      %p393 = por %p391, %p392
      %p394 = scmp.ne.s32.totalorder %s386, %s388
      %p395 = scmp.eq.s32.totalorder %s48, 1
      %p396 = por %p394, %p395
      %p397 = scmp.ne.s32.totalorder %s388, %s389
      %p398 = scmp.eq.s32.totalorder %s48, 0
      %p399 = por %p397, %p398
      %p400 = scmp.ne.s32.totalorder %s388, %s389
      %p401 = scmp.eq.s32.totalorder %s49, 1
      %p402 = por %p400, %p401
      %p404 = scmp.ne.s32.totalorder %s389, %s403
      %p405 = scmp.eq.s32.totalorder %s49, 0
      %p406 = por %p404, %p405
      %s408 = sadd.s32 %s407, 1
      %p411 = scmp.eq.s32.totalorder %s43, 1
      %p412 = scmp.ne.s32.totalorder %s407, %s409
      %p413 = scmp.eq.s32.totalorder %s43, 0
      %p414 = por %p412, %p413
      %p415 = scmp.ne.s32.totalorder %s407, %s409
      %p416 = scmp.eq.s32.totalorder %s48, 1
      %p417 = por %p415, %p416
      %p418 = scmp.ne.s32.totalorder %s409, %s410
      %p419 = scmp.eq.s32.totalorder %s48, 0
      %p420 = por %p418, %p419
      %p421 = scmp.ne.s32.totalorder %s409, %s410
      %p422 = scmp.eq.s32.totalorder %s49, 1
      %p423 = por %p421, %p422
      %p425 = scmp.ne.s32.totalorder %s410, %s424
      %p426 = scmp.eq.s32.totalorder %s49, 0
      %p427 = por %p425, %p426
      %s429 = sadd.s32 %s428, 1
      %p432 = scmp.eq.s32.totalorder %s43, 1
      %p433 = scmp.ne.s32.totalorder %s428, %s430
      %p434 = scmp.eq.s32.totalorder %s43, 0
      %p435 = por %p433, %p434
      %p436 = scmp.ne.s32.totalorder %s428, %s430
      %p437 = scmp.eq.s32.totalorder %s48, 1
      %p438 = por %p436, %p437
      %p439 = scmp.ne.s32.totalorder %s430, %s431
      %p440 = scmp.eq.s32.totalorder %s48, 0
      %p441 = por %p439, %p440
      %p442 = scmp.ne.s32.totalorder %s430, %s431
      %p443 = scmp.eq.s32.totalorder %s49, 1
      %p444 = por %p442, %p443
      %p446 = scmp.ne.s32.totalorder %s431, %s445
      %p447 = scmp.eq.s32.totalorder %s49, 0
      %p448 = por %p446, %p447
      %s450 = sadd.s32 %s449, 1
      %p453 = scmp.eq.s32.totalorder %s43, 1
      %p454 = scmp.ne.s32.totalorder %s449, %s451
      %p455 = scmp.eq.s32.totalorder %s43, 0
      %p456 = por %p454, %p455
      %p457 = scmp.ne.s32.totalorder %s449, %s451
      %p458 = scmp.eq.s32.totalorder %s48, 1
      %p459 = por %p457, %p458
      %p460 = scmp.ne.s32.totalorder %s451, %s452
      %p461 = scmp.eq.s32.totalorder %s48, 0
      %p462 = por %p460, %p461
      %p463 = scmp.ne.s32.totalorder %s451, %s452
      %p464 = scmp.eq.s32.totalorder %s49, 1
      %p465 = por %p463, %p464
      %p467 = scmp.ne.s32.totalorder %s452, %s466
      %p468 = scmp.eq.s32.totalorder %s49, 0
      %p469 = por %p467, %p468
      %s471 = sadd.s32 %s470, 1
      %p474 = scmp.eq.s32.totalorder %s43, 1
      %p475 = scmp.ne.s32.totalorder %s470, %s472
      %p476 = scmp.eq.s32.totalorder %s43, 0
      %p477 = por %p475, %p476
      %p478 = scmp.ne.s32.totalorder %s470, %s472
      %p479 = scmp.eq.s32.totalorder %s48, 1
      %p480 = por %p478, %p479
      %p481 = scmp.ne.s32.totalorder %s472, %s473
      %p482 = scmp.eq.s32.totalorder %s48, 0
      %p483 = por %p481, %p482
      %p484 = scmp.ne.s32.totalorder %s472, %s473
      %p485 = scmp.eq.s32.totalorder %s49, 1
      %p486 = por %p484, %p485
      %p488 = scmp.ne.s32.totalorder %s473, %s487
      %p489 = scmp.eq.s32.totalorder %s49, 0
      %p490 = por %p488, %p489
      %s492 = sadd.s32 %s491, 1
      %p495 = scmp.eq.s32.totalorder %s43, 1
      %p496 = scmp.ne.s32.totalorder %s491, %s493
      %p497 = scmp.eq.s32.totalorder %s43, 0
      %p498 = por %p496, %p497
      %p499 = scmp.ne.s32.totalorder %s491, %s493
      %p500 = scmp.eq.s32.totalorder %s48, 1
      %p501 = por %p499, %p500
      %p502 = scmp.ne.s32.totalorder %s493, %s494
      %p503 = scmp.eq.s32.totalorder %s48, 0
      %p504 = por %p502, %p503
      %p505 = scmp.ne.s32.totalorder %s493, %s494
      %p506 = scmp.eq.s32.totalorder %s49, 1
      %p507 = por %p505, %p506
      %p509 = scmp.ne.s32.totalorder %s494, %s508
      %p510 = scmp.eq.s32.totalorder %s49, 0
      %p511 = por %p509, %p510
      %s513 = sadd.s32 %s512, 1
      %p516 = scmp.eq.s32.totalorder %s43, 1
      %p517 = scmp.ne.s32.totalorder %s512, %s514
      %p518 = scmp.eq.s32.totalorder %s43, 0
      %p519 = por %p517, %p518
      %p520 = scmp.ne.s32.totalorder %s512, %s514
      %p521 = scmp.eq.s32.totalorder %s48, 1
      %p522 = por %p520, %p521
      %p523 = scmp.ne.s32.totalorder %s514, %s515
      %p524 = scmp.eq.s32.totalorder %s48, 0
      %p525 = por %p523, %p524
      %p526 = scmp.ne.s32.totalorder %s514, %s515
      %p527 = scmp.eq.s32.totalorder %s49, 1
      %p528 = por %p526, %p527
      %p530 = scmp.ne.s32.totalorder %s515, %s529
      %p531 = scmp.eq.s32.totalorder %s49, 0
      %p532 = por %p530, %p531
      %s534 = sadd.s32 %s533, 1
      %p537 = scmp.eq.s32.totalorder %s43, 1
      %p538 = scmp.ne.s32.totalorder %s533, %s535
      %p539 = scmp.eq.s32.totalorder %s43, 0
      %p540 = por %p538, %p539
      %p541 = scmp.ne.s32.totalorder %s533, %s535
      %p542 = scmp.eq.s32.totalorder %s48, 1
      %p543 = por %p541, %p542
      %p544 = scmp.ne.s32.totalorder %s535, %s536
      %p545 = scmp.eq.s32.totalorder %s48, 0
      %p546 = por %p544, %p545
      %p547 = scmp.ne.s32.totalorder %s535, %s536
      %p548 = scmp.eq.s32.totalorder %s49, 1
      %p549 = por %p547, %p548
      %p551 = scmp.ne.s32.totalorder %s536, %s550
      %p552 = scmp.eq.s32.totalorder %s49, 0
      %p553 = por %p551, %p552
      %s554 = ssub.s32 %s43, %s50
      %p555 = scmp.eq.s32.totalorder %s554, 0
      %s557 = sadd.s32 %s556, 1
      %s558 = scalar_select %p555, %s556, %s557
      %p561 = pneg %p555
      %p562 = scmp.eq.s32.totalorder %s43, 1
      %p563 = por %p561, %p562
      %p564 = scmp.ne.s32.totalorder %s556, %s559
      %p565 = scmp.eq.s32.totalorder %s43, 0
      %p566 = por %p564, %p565
      %p567 = scmp.ne.s32.totalorder %s556, %s559
      %p568 = scmp.eq.s32.totalorder %s48, 1
      %p569 = por %p567, %p568
      %p570 = scmp.ne.s32.totalorder %s559, %s560
      %p571 = scmp.eq.s32.totalorder %s48, 0
      %p572 = por %p570, %p571
      %p573 = scmp.ne.s32.totalorder %s559, %s560
      %p574 = scmp.eq.s32.totalorder %s49, 1
      %p575 = por %p573, %p574
      %p577 = scmp.ne.s32.totalorder %s560, %s576
      %p578 = scmp.eq.s32.totalorder %s49, 0
      %p579 = por %p577, %p578
      %s580 = ssub.s32 %s43, %s50
      %p581 = scmp.eq.s32.totalorder %s580, 0
      %s583 = sadd.s32 %s582, 1
      %s584 = scalar_select %p581, %s582, %s583
      %p587 = pneg %p581
      %p588 = scmp.eq.s32.totalorder %s43, 1
      %p589 = por %p587, %p588
      %p590 = scmp.ne.s32.totalorder %s582, %s585
      %p591 = scmp.eq.s32.totalorder %s43, 0
      %p592 = por %p590, %p591
      %p593 = scmp.ne.s32.totalorder %s582, %s585
      %p594 = scmp.eq.s32.totalorder %s48, 1
      %p595 = por %p593, %p594
      %p596 = scmp.ne.s32.totalorder %s585, %s586
      %p597 = scmp.eq.s32.totalorder %s48, 0
      %p598 = por %p596, %p597
      %p599 = scmp.ne.s32.totalorder %s585, %s586
      %p600 = scmp.eq.s32.totalorder %s49, 1
      %p601 = por %p599, %p600
      %p603 = scmp.ne.s32.totalorder %s586, %s602
      %p604 = scmp.eq.s32.totalorder %s49, 0
      %p605 = por %p603, %p604
      %p606 = scmp.le.s32.totalorder 1, %s43
      %p607 = scmp.lt.s32.totalorder %s43, 3
      %p608 = pnand %p606, %p607
      %p609 = pneg %p608
      // Predicated region
      $region9: #{_decoder_layer_impl.1} parent=5 // pred_check
        _
      $region10: #{_decoder_layer_impl.1} parent=5 // pred_check_branch
        %611 = sbr.rel (%p608) target = $region12
      $region11: #{_decoder_layer_impl.1} parent=5 // pred_region
        %s612 = ssub.s32 %s43, 1
        // Predicated region
        $region13: #{_decoder_layer_impl.1} parent=11 // pred_check
          %p613 = pneg %p168
        $region14: #{_decoder_layer_impl.1} parent=11 // pred_check_branch
          %615 = sbr.rel (%p613) target = $region16
        $region15: #{_decoder_layer_impl.1} parent=11 // pred_region
          _
        $region16: #{_decoder_layer_impl.1} parent=11 // pred_fallthru
          _
        // Predicated region
        $region17: #{_decoder_layer_impl.1} parent=11 // pred_check
          %p616 = pneg %p189
        $region18: #{_decoder_layer_impl.1} parent=11 // pred_check_branch
          %618 = sbr.rel (%p616) target = $region20
        $region19: #{_decoder_layer_impl.1} parent=11 // pred_region
          _
        $region20: #{_decoder_layer_impl.1} parent=11 // pred_fallthru
          _
        // Predicated region
        $region21: #{_decoder_layer_impl.1} parent=11 // pred_check
          %p619 = pneg %p210
        $region22: #{_decoder_layer_impl.1} parent=11 // pred_check_branch
          %621 = sbr.rel (%p619) target = $region24
        $region23: #{_decoder_layer_impl.1} parent=11 // pred_region
          _
        $region24: #{_decoder_layer_impl.1} parent=11 // pred_fallthru
          _
        // Predicated region
        $region25: #{_decoder_layer_impl.1} parent=11 // pred_check
          %p622 = pneg %p231
        $region26: #{_decoder_layer_impl.1} parent=11 // pred_check_branch
          %624 = sbr.rel (%p622) target = $region28
        $region27: #{_decoder_layer_impl.1} parent=11 // pred_region
          _
        $region28: #{_decoder_layer_impl.1} parent=11 // pred_fallthru
          _
        // Predicated region
        $region29: #{_decoder_layer_impl.1} parent=11 // pred_check
          %p625 = pneg %p252
        $region30: #{_decoder_layer_impl.1} parent=11 // pred_check_branch
          %627 = sbr.rel (%p625) target = $region32
        $region31: #{_decoder_layer_impl.1} parent=11 // pred_region
          _
        $region32: #{_decoder_layer_impl.1} parent=11 // pred_fallthru
          _
        // Predicated region
        $region33: #{_decoder_layer_impl.1} parent=11 // pred_check
          %p628 = pneg %p273
        $region34: #{_decoder_layer_impl.1} parent=11 // pred_check_branch
          %630 = sbr.rel (%p628) target = $region36
        $region35: #{_decoder_layer_impl.1} parent=11 // pred_region
          _
        $region36: #{_decoder_layer_impl.1} parent=11 // pred_fallthru
          _
        // Predicated region
        $region37: #{_decoder_layer_impl.1} parent=11 // pred_check
          %p631 = pneg %p294
        $region38: #{_decoder_layer_impl.1} parent=11 // pred_check_branch
          %633 = sbr.rel (%p631) target = $region40
        $region39: #{_decoder_layer_impl.1} parent=11 // pred_region
          _
        $region40: #{_decoder_layer_impl.1} parent=11 // pred_fallthru
          _
        // Predicated region
        $region41: #{_decoder_layer_impl.1} parent=11 // pred_check
          %p634 = pneg %p315
        $region42: #{_decoder_layer_impl.1} parent=11 // pred_check_branch
          %636 = sbr.rel (%p634) target = $region44
        $region43: #{_decoder_layer_impl.1} parent=11 // pred_region
          _
        $region44: #{_decoder_layer_impl.1} parent=11 // pred_fallthru
          _
        // Predicated region
        $region45: #{_decoder_layer_impl.1} parent=11 // pred_check
          %p637 = pneg %p336
        $region46: #{_decoder_layer_impl.1} parent=11 // pred_check_branch
          %639 = sbr.rel (%p637) target = $region48
        $region47: #{_decoder_layer_impl.1} parent=11 // pred_region
          _
        $region48: #{_decoder_layer_impl.1} parent=11 // pred_fallthru
          _
        // Predicated region
        $region49: #{_decoder_layer_impl.1} parent=11 // pred_check
          %p640 = pneg %p357
        $region50: #{_decoder_layer_impl.1} parent=11 // pred_check_branch
          %642 = sbr.rel (%p640) target = $region52
        $region51: #{_decoder_layer_impl.1} parent=11 // pred_region
          _
        $region52: #{_decoder_layer_impl.1} parent=11 // pred_fallthru
          _
        // Predicated region
        $region53: #{_decoder_layer_impl.1} parent=11 // pred_check
          %p643 = pneg %p378
        $region54: #{_decoder_layer_impl.1} parent=11 // pred_check_branch
          %645 = sbr.rel (%p643) target = $region56
        $region55: #{_decoder_layer_impl.1} parent=11 // pred_region
          _
        $region56: #{_decoder_layer_impl.1} parent=11 // pred_fallthru
          _
        // Predicated region
        $region57: #{_decoder_layer_impl.1} parent=11 // pred_check
          %p646 = pneg %p399
        $region58: #{_decoder_layer_impl.1} parent=11 // pred_check_branch
          %648 = sbr.rel (%p646) target = $region60
        $region59: #{_decoder_layer_impl.1} parent=11 // pred_region
          _
        $region60: #{_decoder_layer_impl.1} parent=11 // pred_fallthru
          _
        // Predicated region
        $region61: #{_decoder_layer_impl.1} parent=11 // pred_check
          %p649 = pneg %p420
        $region62: #{_decoder_layer_impl.1} parent=11 // pred_check_branch
          %651 = sbr.rel (%p649) target = $region64
        $region63: #{_decoder_layer_impl.1} parent=11 // pred_region
          _
        $region64: #{_decoder_layer_impl.1} parent=11 // pred_fallthru
          _
        // Predicated region
        $region65: #{_decoder_layer_impl.1} parent=11 // pred_check
          %p652 = pneg %p441
        $region66: #{_decoder_layer_impl.1} parent=11 // pred_check_branch
          %654 = sbr.rel (%p652) target = $region68
        $region67: #{_decoder_layer_impl.1} parent=11 // pred_region
          _
        $region68: #{_decoder_layer_impl.1} parent=11 // pred_fallthru
          _
        // Predicated region
        $region69: #{_decoder_layer_impl.1} parent=11 // pred_check
          %p655 = pneg %p462
        $region70: #{_decoder_layer_impl.1} parent=11 // pred_check_branch
          %657 = sbr.rel (%p655) target = $region72
        $region71: #{_decoder_layer_impl.1} parent=11 // pred_region
          _
        $region72: #{_decoder_layer_impl.1} parent=11 // pred_fallthru
          _
        // Predicated region
        $region73: #{_decoder_layer_impl.1} parent=11 // pred_check
          %p658 = pneg %p483
        $region74: #{_decoder_layer_impl.1} parent=11 // pred_check_branch
          %660 = sbr.rel (%p658) target = $region76
        $region75: #{_decoder_layer_impl.1} parent=11 // pred_region
          _
        $region76: #{_decoder_layer_impl.1} parent=11 // pred_fallthru
          _
        // Predicated region
        $region77: #{_decoder_layer_impl.1} parent=11 // pred_check
          %p661 = pneg %p504
        $region78: #{_decoder_layer_impl.1} parent=11 // pred_check_branch
          %663 = sbr.rel (%p661) target = $region80
        $region79: #{_decoder_layer_impl.1} parent=11 // pred_region
          _
        $region80: #{_decoder_layer_impl.1} parent=11 // pred_fallthru
          _
        // Predicated region
        $region81: #{_decoder_layer_impl.1} parent=11 // pred_check
          %p664 = pneg %p525
        $region82: #{_decoder_layer_impl.1} parent=11 // pred_check_branch
          %666 = sbr.rel (%p664) target = $region84
        $region83: #{_decoder_layer_impl.1} parent=11 // pred_region
          _
        $region84: #{_decoder_layer_impl.1} parent=11 // pred_fallthru
          _
        // Predicated region
        $region85: #{_decoder_layer_impl.1} parent=11 // pred_check
          %p667 = pneg %p546
        $region86: #{_decoder_layer_impl.1} parent=11 // pred_check_branch
          %669 = sbr.rel (%p667) target = $region88
        $region87: #{_decoder_layer_impl.1} parent=11 // pred_region
          _
        $region88: #{_decoder_layer_impl.1} parent=11 // pred_fallthru
          _
      $region12: #{_decoder_layer_impl.1} parent=5 // pred_fallthru
        _
      %p670 = scmp.lt.s32.totalorder %s43, 2
      // Predicated region
      $region89: #{_decoder_layer_impl.1} parent=5 // pred_check
        %p671 = pneg %p670
      $region90: #{_decoder_layer_impl.1} parent=5 // pred_check_branch
        %673 = sbr.rel (%p671) target = $region92
      $region91: #{_decoder_layer_impl.1} parent=5 // pred_region
        // Predicated region
        $region93: #{_decoder_layer_impl.1} parent=91 // pred_check
          %p674 = pneg %p63
        $region94: #{_decoder_layer_impl.1} parent=91 // pred_check_branch
          %676 = sbr.rel (%p674) target = $region96
        $region95: #{_decoder_layer_impl.1} parent=91 // pred_region
          %p677 = scmp.lt.s32.totalorder %s43, 1
          %s678 = scalar_select %p677, %s43, 1
          %s679 = smul.addr %s678, 8
          %s680 = scalar_lea.vmem %s0, %s679
        $region96: #{_decoder_layer_impl.1} parent=91 // pred_fallthru
          _
        // Predicated region
        $region97: #{_decoder_layer_impl.1} parent=91 // pred_check
          %p681 = pneg %p89
        $region98: #{_decoder_layer_impl.1} parent=91 // pred_check_branch
          %683 = sbr.rel (%p681) target = $region100
        $region99: #{_decoder_layer_impl.1} parent=91 // pred_region
          %p684 = scmp.lt.s32.totalorder %s43, 1
          %s685 = scalar_select %p684, %s43, 1
          %s686 = smul.addr %s685, 2
          %s687 = smul.addr %s686, 8
          %s688 = scalar_lea.vmem %s1, %s687
        $region100: #{_decoder_layer_impl.1} parent=91 // pred_fallthru
          _
        // Predicated region
        $region101: #{_decoder_layer_impl.1} parent=91 // pred_check
          %p689 = pneg %p115
        $region102: #{_decoder_layer_impl.1} parent=91 // pred_check_branch
          %691 = sbr.rel (%p689) target = $region104
        $region103: #{_decoder_layer_impl.1} parent=91 // pred_region
          %s692 = sand.u32 %s105, 1
          %s693 = scalar_lea.sflag [#allocation3], %s692
          %s694 = sand.u32 %s105, 1
          %s695 = smul.addr %s694, 8
          %s696 = scalar_lea.vmem [#allocation2], %s695
          %s698 = ssub.s32 128, 128
          %699 = vsyncadd %s693, %s698
          %s700 = smul.addr %s43, 128
          %s701 = scalar_lea.hbm %s2, %s700
          %s703 = sshll.u32 %s696, 4
          %s704 = int_to_ptr.vmem [resolvable:$true] %s703
          %706 = dma.hbm_to_vmem [thread:$0]  %s701, 128, %s704, %s693
        $region104: #{_decoder_layer_impl.1} parent=91 // pred_fallthru
          _
        // Predicated region
        $region105: #{_decoder_layer_impl.1} parent=91 // pred_check
          %p707 = pneg %p141
        $region106: #{_decoder_layer_impl.1} parent=91 // pred_check_branch
          %709 = sbr.rel (%p707) target = $region108
        $region107: #{_decoder_layer_impl.1} parent=91 // pred_region
          %s710 = sand.u32 %s131, 1
          %s711 = scalar_lea.sflag [#allocation6], %s710
          %s712 = sand.u32 %s131, 1
          %s713 = scalar_lea.vmem [#allocation5], %s712
          %s715 = ssub.s32 16, 16
          %716 = vsyncadd %s711, %s715
          %s717 = smul.addr %s43, 16
          %s718 = scalar_lea.hbm %s3, %s717
          %s720 = sshll.u32 %s713, 4
          %s721 = int_to_ptr.vmem [resolvable:$true] %s720
          %723 = dma.hbm_to_vmem [thread:$0]  %s718, 16, %s721, %s711
        $region108: #{_decoder_layer_impl.1} parent=91 // pred_fallthru
          _
      $region92: #{_decoder_layer_impl.1} parent=5 // pred_fallthru
        _
      %p724 = scmp.le.s32.totalorder 1, %s43
      %p725 = scmp.lt.s32.totalorder %s43, 3
      %p726 = pnand %p724, %p725
      %p727 = pneg %p726
      // Predicated region
      $region109: #{_decoder_layer_impl.1} parent=5 // pred_check
        _
      $region110: #{_decoder_layer_impl.1} parent=5 // pred_check_branch
        %729 = sbr.rel (%p726) target = $region112
      $region111: #{_decoder_layer_impl.1} parent=5 // pred_region
        %s730 = ssub.s32 %s43, 1
        %s731 = sand.u32 %s108, 1
        %s732 = scalar_lea.sflag [#allocation3], %s731
        %s733 = sand.u32 %s108, 1
        %s734 = smul.addr %s733, 8
        %s735 = scalar_lea.vmem [#allocation2], %s734
        // Predicated region
        $region113: #{_decoder_layer_impl.1} parent=111 // pred_check
          %p736 = pneg %p121
        $region114: #{_decoder_layer_impl.1} parent=111 // pred_check_branch
          %738 = sbr.rel (%p736) target = $region116
        $region115: #{_decoder_layer_impl.1} parent=111 // pred_region
          %739 = dma.done %s732, 128
        $region116: #{_decoder_layer_impl.1} parent=111 // pred_fallthru
          _
        %s740 = sand.u32 %s134, 1
        %s741 = scalar_lea.sflag [#allocation6], %s740
        %s742 = sand.u32 %s134, 1
        %s743 = scalar_lea.vmem [#allocation5], %s742
        // Predicated region
        $region117: #{_decoder_layer_impl.1} parent=111 // pred_check
          %p744 = pneg %p147
        $region118: #{_decoder_layer_impl.1} parent=111 // pred_check_branch
          %746 = sbr.rel (%p744) target = $region120
        $region119: #{_decoder_layer_impl.1} parent=111 // pred_region
          %747 = dma.done %s741, 16
        $region120: #{_decoder_layer_impl.1} parent=111 // pred_fallthru
          _
        %p748 = scmp.lt.s32.totalorder %s48, 1
        %s749 = scalar_select %p748, %s48, 1
        %s750 = smul.addr %s749, 8
        %s751 = scalar_lea.vmem %s0, %s750
        %p752 = pneg %p69
        %p753 = pneg %p66
        %p754 = scmp.lt.s32.totalorder %s48, 1
        %s755 = scalar_select %p754, %s48, 1
        %s756 = smul.addr %s755, 2
        %s757 = smul.addr %s756, 8
        %s758 = scalar_lea.vmem %s1, %s757
        %p759 = pneg %p95
        %p760 = pneg %p92
        %s761 = sand.u32 %s108, 1
        %s762 = scalar_lea.sflag [#allocation3], %s761
        %s763 = sand.u32 %s108, 1
        %s764 = smul.addr %s763, 8
        %s765 = scalar_lea.vmem [#allocation2], %s764
        %p766 = pneg %p121
        %p767 = pneg %p118
        %s768 = sand.u32 %s134, 1
        %s769 = scalar_lea.sflag [#allocation6], %s768
        %s770 = sand.u32 %s134, 1
        %s771 = scalar_lea.vmem [#allocation5], %s770
        %p772 = pneg %p147
        %p773 = pneg %p144
        %p774 = pneg %p168
        %p775 = pneg %p165
        %p776 = pneg %p189
        %p777 = pneg %p186
        %p778 = pneg %p210
        %p779 = pneg %p207
        %p780 = pneg %p231
        %p781 = pneg %p228
        %p782 = pneg %p252
        %p783 = pneg %p249
        %p784 = pneg %p273
        %p785 = pneg %p270
        %p786 = pneg %p294
        %p787 = pneg %p291
        %p788 = pneg %p315
        %p789 = pneg %p312
        %p790 = pneg %p336
        %p791 = pneg %p333
        %p792 = pneg %p357
        %p793 = pneg %p354
        %p794 = pneg %p378
        %p795 = pneg %p375
        %p796 = pneg %p399
        %p797 = pneg %p396
        %p798 = pneg %p420
        %p799 = pneg %p417
        %p800 = pneg %p441
        %p801 = pneg %p438
        %p802 = pneg %p462
        %p803 = pneg %p459
        %p804 = pneg %p483
        %p805 = pneg %p480
        %p806 = pneg %p504
        %p807 = pneg %p501
        %p808 = pneg %p525
        %p809 = pneg %p522
        %p810 = pneg %p546
        %p811 = pneg %p543
        %p812 = pneg %p572
        %p813 = pneg %p569
        %s814 = sand.u32 %s559, 1
        %s815 = scalar_lea.sflag [#allocation4], %s814
        %s816 = sand.u32 %s559, 1
        %s817 = smul.addr %s816, 8
        %s818 = scalar_lea.vmem [#allocation7], %s817
        %p819 = pneg %p598
        %p820 = pneg %p595
        %s821 = sand.u32 %s585, 1
        %s822 = scalar_lea.sflag [#allocation9], %s821
        %s823 = sand.u32 %s585, 1
        %s824 = smul.addr %s823, 32
        %s825 = scalar_lea.vmem [#allocation8], %s824
        %p826 = scmp.lt.s32.totalorder %s48, 1
        %s827 = scalar_select %p826, %s48, 1
        %s828 = smul.addr %s827, 8
        %s829 = scalar_lea.vmem %s0, %s828
        %p830 = scmp.lt.s32.totalorder %s48, 1
        %s831 = scalar_select %p830, %s48, 1
        %s832 = smul.addr %s831, 2
        %s833 = smul.addr %s832, 8
        %s834 = scalar_lea.vmem %s1, %s833
        %v835 = vld [vmem:[%s829] sm:$0xff]
        %v836 = vld [vmem:[%s834] sm:$0xff]
        %v837 = vld [vmem:[%s834 + $0x8] sm:$0x3]
        %v838 = vld [vmem:[%s18] sm:$0x3f]
        %v839 = vld [vmem:[%s735] sm:$0xff]
        %vm840 = vcmp.eq.s32.totalorder %v839, 0
        %v841 = vsel %vm840, -1e+10, 0.0
        %843 = vrot.lane.b32.xlu0 %v841, 8
        %v844 = vpop.permute.xlu0 %843
        %846 = vrot.lane.b32.xlu0 %v841, 16
        %v847 = vpop.permute.xlu0 %846
        %849 = vrot.lane.b32.xlu0 %v841, 24
        %v850 = vpop.permute.xlu0 %849
        %vm852 = vcmask 64512
        %v853 = vsel %vm852, %v841, %v844
        %vm854 = vcmask 130048
        %v855 = vsel %vm854, %v853, %v847
        %vm856 = vcmask 195584
        %v857 = vsel %vm856, %v855, %v850
        %v858 = vld [vmem:[%s743] sm:$0x1]
        %vm859 = vcmp.eq.s32.totalorder %v858, 0
        %v860 = vsel %vm859, -1e+10, 0.0
        %v862 = vlaneseq
        %v863 = vshrl.u32 %v862, 7
        %v864 = vsub.s32 0, %v863
        %v865 = vrot.slane %v860, %v864
        %866 = vrot.lane.b32.xlu0 %v865, 10
        %v867 = vpop.permute.xlu0 %866
        %869 = vrot.lane.b32.xlu0 %v865, 20
        %v870 = vpop.permute.xlu0 %869
        %872 = vrot.lane.b32.xlu0 %v865, 30
        %v873 = vpop.permute.xlu0 %872
        %vm875 = vcmask 80896
        %v876 = vsel %vm875, %v860, %v867
        %vm877 = vcmask 162816
        %v878 = vsel %vm877, %v876, %v870
        %vm879 = vcmask 244736
        %v880 = vsel %vm879, %v878, %v873
        %v881 = vld [vmem:[%s4] sm:$0xff]
        %v882 = vld [vmem:[%s4 + $0x8] sm:$0xff]
        %v883 = vld [vmem:[%s4 + $0x10] sm:$0xff]
        %v884 = vld [vmem:[%s4 + $0x18] sm:$0xff]
        %v885 = vld [vmem:[%s5] sm:$0x1]
        %v887 = vlaneseq
        %v888 = vshrl.u32 %v887, 7
        %v889 = vsub.s32 0, %v888
        %v890 = vrot.slane %v885, %v889
        %vm892 = vcmask 261120
        %v894 = vsel %vm892, %v835, 0
        %896 = vmatprep.subr.mxu0 0.0
        %897 = vmatpush1.msra.mxu0 %v881
        %898 = vmatprep.subr.mxu0 0.0
        %899 = vmatpush1.msra.mxu0 %v882
        %900 = vmatprep.subr.mxu0 0.0
        %901 = vmatpush1.msra.mxu0 %v883
        %902 = vmatprep.subr.mxu0 0.0
        %903 = vmatpush1.msra.mxu0 %v884
        %904 = vmatprep.subr.mxu0 0.0
        %905 = vmatpush1.msra.mxu0 0.0
        %906 = vmatprep.subr.mxu0 0.0
        %907 = vmatpush1.msra.mxu0 0.0
        %908 = vmatprep.subr.mxu0 0.0
        %909 = vmatpush1.msra.mxu0 0.0
        %910 = vmatprep.subr.mxu0 0.0
        %911 = vmatpush1.msra.mxu0 0.0
        %912 = vmatprep.subr.mxu0 0.0
        %913 = vmatpush1.msra.mxu0 0.0
        %914 = vmatprep.subr.mxu0 0.0
        %915 = vmatpush1.msra.mxu0 0.0
        %916 = vmatprep.subr.mxu0 0.0
        %917 = vmatpush1.msra.mxu0 0.0
        %918 = vmatprep.subr.mxu0 0.0
        %919 = vmatpush1.msra.mxu0 0.0
        %920 = vmatprep.subr.mxu0 0.0
        %921 = vmatpush1.msra.mxu0 0.0
        %922 = vmatprep.subr.mxu0 0.0
        %923 = vmatpush1.msra.mxu0 0.0
        %924 = vmatprep.subr.mxu0 0.0
        %925 = vmatpush1.msra.mxu0 0.0
        %926 = vmatprep.subr.mxu0 0.0
        %927 = vmatpush1.msra.mxu0 0.0
        %928 = vmatprep.subr.mxu0 0.0
        %929 = vmatpush1.msra.mxu0 0.0
        %930 = vmatprep.subr.mxu0 0.0
        %931 = vmatpush1.msra.mxu0 0.0
        %932 = vmatprep.subr.mxu0 0.0
        %933 = vmatpush1.msra.mxu0 0.0
        %934 = vmatprep.subr.mxu0 0.0
        %935 = vmatpush1.msra.mxu0 0.0
        %936 = vmatprep.subr.mxu0 0.0
        %937 = vmatpush1.msra.mxu0 0.0
        %938 = vmatprep.subr.mxu0 0.0
        %939 = vmatpush1.msra.mxu0 0.0
        %940 = vmatprep.subr.mxu0 0.0
        %941 = vmatpush1.msra.mxu0 0.0
        %942 = vmatprep.subr.mxu0 0.0
        %943 = vmatpush1.msra.mxu0 0.0
        %944 = vmatprep.subr.mxu0 0.0
        %945 = vmatpush1.msra.mxu0 0.0
        %946 = vmatprep.subr.mxu0 0.0
        %947 = vmatpush1.msra.mxu0 0.0
        %948 = vmatprep.subr.mxu0 0.0
        %949 = vmatpush1.msra.mxu0 0.0
        %950 = vmatprep.subr.mxu0 0.0
        %951 = vmatpush1.msra.mxu0 0.0
        %952 = vmatprep.subr.mxu0 0.0
        %953 = vmatpush1.msra.mxu0 0.0
        %954 = vmatprep.subr.mxu0 0.0
        %955 = vmatpush1.msra.mxu0 0.0
        %956 = vmatprep.subr.mxu0 0.0
        %957 = vmatpush1.msra.mxu0 0.0
        %958 = vmatprep.subr.mxu0 0.0
        %959 = vmatpush1.msra.mxu0 0.0
        %960 = vmatprep.mubr.f32.mxu0 0.0
        %961 = vmatmul.mubr.f32.gmra.mrb[0].mxu0 %v894
        %v962 = vpop.f32.mrb[0].mxu0
        %v963 = vadd.f32 %v890, %v962
        %v964 = vpop.f32.mrb[0].mxu0
        %965 = vdwg.mxu0
        %v966 = vmul.f32 %v963, 0.35355338
        %v967 = vld [vmem:[%s19] sm:$0xff]
        %v968 = vld [vmem:[%s19 + $0x8] sm:$0xff]
        %v969 = vld [vmem:[%s19 + $0x10] sm:$0xff]
        %v970 = vld [vmem:[%s19 + $0x18] sm:$0xff]
        %v971 = vld [vmem:[%s20] sm:$0xff]
        %v972 = vld [vmem:[%s20 + $0x8] sm:$0xff]
        %v973 = vld [vmem:[%s20 + $0x10] sm:$0xff]
        %v974 = vld [vmem:[%s20 + $0x18] sm:$0xff]
        %v975 = vld [vmem:[%s6] sm:$0xff]
        %v976 = vld [vmem:[%s6 + $0x8] sm:$0xff]
        %v977 = vld [vmem:[%s6 + $0x10] sm:$0xff]
        %v978 = vld [vmem:[%s6 + $0x18] sm:$0xff]
        %v979 = vld [vmem:[%s7] sm:$0x1]
        %984 = vrot.lane.b32.xlu0 %v967, 32
        %v985 = vpop.permute.xlu0 %984
        %986 = vrot.lane.b32.xlu0 %v968, 32
        %v987 = vpop.permute.xlu0 %986
        %988 = vrot.lane.b32.xlu0 %v969, 32
        %v989 = vpop.permute.xlu0 %988
        %990 = vrot.lane.b32.xlu0 %v970, 32
        %v991 = vpop.permute.xlu0 %990
        %v996 = vmul.f32 %v963, %v985
        %v997 = vmul.f32 %v963, %v987
        %v998 = vmul.f32 %v963, %v989
        %v999 = vmul.f32 %v963, %v991
        %1000 = vrot.lane.b32.xlu0 %v967, 64
        %v1001 = vpop.permute.xlu0 %1000
        %1002 = vrot.lane.b32.xlu0 %v968, 64
        %v1003 = vpop.permute.xlu0 %1002
        %1004 = vrot.lane.b32.xlu0 %v969, 64
        %v1005 = vpop.permute.xlu0 %1004
        %1006 = vrot.lane.b32.xlu0 %v970, 64
        %v1007 = vpop.permute.xlu0 %1006
        %v1012 = vmul.f32 %v963, %v1001
        %v1013 = vmul.f32 %v963, %v1003
        %v1014 = vmul.f32 %v963, %v1005
        %v1015 = vmul.f32 %v963, %v1007
        %1020 = vrot.lane.b32.xlu0 %v996, 96
        %v1021 = vpop.permute.xlu0 %1020
        %1022 = vrot.lane.b32.xlu0 %v997, 96
        %v1023 = vpop.permute.xlu0 %1022
        %1024 = vrot.lane.b32.xlu0 %v998, 96
        %v1025 = vpop.permute.xlu0 %1024
        %1026 = vrot.lane.b32.xlu0 %v999, 96
        %v1027 = vpop.permute.xlu0 %1026
        %v1029 = vsel %vm892, %v966, 0
        %v1031 = vsel %vm892, %v1021, 0
        %v1033 = vsel %vm892, %v1023, 0
        %v1035 = vsel %vm892, %v1025, 0
        %v1037 = vsel %vm892, %v1027, 0
        %1039 = vmatprep.subr.mxu0 0.0
        %1040 = vmatpush1.xpose.msra.mxu0 %v1031
        %1041 = vmatprep.subr.mxu0 0.0
        %1042 = vmatpush1.xpose.msra.mxu0 %v1033
        %1043 = vmatprep.subr.mxu0 0.0
        %1044 = vmatpush1.xpose.msra.mxu0 %v1035
        %1045 = vmatprep.subr.mxu0 0.0
        %1046 = vmatpush1.xpose.msra.mxu0 %v1037
        %1047 = vmatprep.subr.mxu0 0.0
        %1048 = vmatpush1.xpose.msra.mxu0 0.0
        %1049 = vmatprep.subr.mxu0 0.0
        %1050 = vmatpush1.xpose.msra.mxu0 0.0
        %1051 = vmatprep.subr.mxu0 0.0
        %1052 = vmatpush1.xpose.msra.mxu0 0.0
        %1053 = vmatprep.subr.mxu0 0.0
        %1054 = vmatpush1.xpose.msra.mxu0 0.0
        %1055 = vmatprep.subr.mxu0 0.0
        %1056 = vmatpush1.xpose.msra.mxu0 0.0
        %1057 = vmatprep.subr.mxu0 0.0
        %1058 = vmatpush1.xpose.msra.mxu0 0.0
        %1059 = vmatprep.subr.mxu0 0.0
        %1060 = vmatpush1.xpose.msra.mxu0 0.0
        %1061 = vmatprep.subr.mxu0 0.0
        %1062 = vmatpush1.xpose.msra.mxu0 0.0
        %1063 = vmatprep.subr.mxu0 0.0
        %1064 = vmatpush1.xpose.msra.mxu0 0.0
        %1065 = vmatprep.subr.mxu0 0.0
        %1066 = vmatpush1.xpose.msra.mxu0 0.0
        %1067 = vmatprep.subr.mxu0 0.0
        %1068 = vmatpush1.xpose.msra.mxu0 0.0
        %1069 = vmatprep.subr.mxu0 0.0
        %1070 = vmatpush1.xpose.msra.mxu0 0.0
        %1071 = vmatprep.subr.mxu0 0.0
        %1072 = vmatpush1.xpose.msra.mxu0 0.0
        %1073 = vmatprep.subr.mxu0 0.0
        %1074 = vmatpush1.xpose.msra.mxu0 0.0
        %1075 = vmatprep.subr.mxu0 0.0
        %1076 = vmatpush1.xpose.msra.mxu0 0.0
        %1077 = vmatprep.subr.mxu0 0.0
        %1078 = vmatpush1.xpose.msra.mxu0 0.0
        %1079 = vmatprep.subr.mxu0 0.0
        %1080 = vmatpush1.xpose.msra.mxu0 0.0
        %1081 = vmatprep.subr.mxu0 0.0
        %1082 = vmatpush1.xpose.msra.mxu0 0.0
        %1083 = vmatprep.subr.mxu0 0.0
        %1084 = vmatpush1.xpose.msra.mxu0 0.0
        %1085 = vmatprep.subr.mxu0 0.0
        %1086 = vmatpush1.xpose.msra.mxu0 0.0
        %1087 = vmatprep.subr.mxu0 0.0
        %1088 = vmatpush1.xpose.msra.mxu0 0.0
        %1089 = vmatprep.subr.mxu0 0.0
        %1090 = vmatpush1.xpose.msra.mxu0 0.0
        %1091 = vmatprep.subr.mxu0 0.0
        %1092 = vmatpush1.xpose.msra.mxu0 0.0
        %1093 = vmatprep.subr.mxu0 0.0
        %1094 = vmatpush1.xpose.msra.mxu0 0.0
        %1095 = vmatprep.subr.mxu0 0.0
        %1096 = vmatpush1.xpose.msra.mxu0 0.0
        %1097 = vmatprep.subr.mxu0 0.0
        %1098 = vmatpush1.xpose.msra.mxu0 0.0
        %1099 = vmatprep.subr.mxu0 0.0
        %1100 = vmatpush1.xpose.msra.mxu0 0.0
        %1101 = vmatprep.subr.mxu0 0.0
        %1102 = vmatpush1.xpose.msra.mxu0 0.0
        %1103 = vmatprep.mubr.f32.mxu0 0.0
        %1104 = vmatmul.mubr.f32.gmra.mrb[0].mxu0 %v1029
        %v1105 = vpop.f32.mrb[0].mxu0
        %v1106 = vadd.f32 %v857, %v1105
        %v1107 = vpop.f32.mrb[0].mxu0
        %1108 = vdwg.mxu0
        %v1109 = vsel %vm892, %v1106, -inf
        %1110 = vmax.xlane.f32.xlu0 %v1109
        %v1111 = vpop.xlane.xlu0 %1110
        %v1112 = vsub.f32 %v1106, %v1111
        %v1113 = vmul.f32 %v1112, 1.442695
        %v1114 = vpow.pop %v1113
        %v1116 = vsel %vm892, %v1114, 0
        %1118 = vmatprep.subr.mxu0 0.0
        %1119 = vmatpush1.msra.mxu0 %v971
        %1120 = vmatprep.subr.mxu0 0.0
        %1121 = vmatpush1.msra.mxu0 %v972
        %1122 = vmatprep.subr.mxu0 0.0
        %1123 = vmatpush1.msra.mxu0 %v973
        %1124 = vmatprep.subr.mxu0 0.0
        %1125 = vmatpush1.msra.mxu0 %v974
        %1126 = vmatprep.subr.mxu0 0.0
        %1127 = vmatpush1.msra.mxu0 0.0
        %1128 = vmatprep.subr.mxu0 0.0
        %1129 = vmatpush1.msra.mxu0 0.0
        %1130 = vmatprep.subr.mxu0 0.0
        %1131 = vmatpush1.msra.mxu0 0.0
        %1132 = vmatprep.subr.mxu0 0.0
        %1133 = vmatpush1.msra.mxu0 0.0
        %1134 = vmatprep.subr.mxu0 0.0
        %1135 = vmatpush1.msra.mxu0 0.0
        %1136 = vmatprep.subr.mxu0 0.0
        %1137 = vmatpush1.msra.mxu0 0.0
        %1138 = vmatprep.subr.mxu0 0.0
        %1139 = vmatpush1.msra.mxu0 0.0
        %1140 = vmatprep.subr.mxu0 0.0
        %1141 = vmatpush1.msra.mxu0 0.0
        %1142 = vmatprep.subr.mxu0 0.0
        %1143 = vmatpush1.msra.mxu0 0.0
        %1144 = vmatprep.subr.mxu0 0.0
        %1145 = vmatpush1.msra.mxu0 0.0
        %1146 = vmatprep.subr.mxu0 0.0
        %1147 = vmatpush1.msra.mxu0 0.0
        %1148 = vmatprep.subr.mxu0 0.0
        %1149 = vmatpush1.msra.mxu0 0.0
        %1150 = vmatprep.subr.mxu0 0.0
        %1151 = vmatpush1.msra.mxu0 0.0
        %1152 = vmatprep.subr.mxu0 0.0
        %1153 = vmatpush1.msra.mxu0 0.0
        %1154 = vmatprep.subr.mxu0 0.0
        %1155 = vmatpush1.msra.mxu0 0.0
        %1156 = vmatprep.subr.mxu0 0.0
        %1157 = vmatpush1.msra.mxu0 0.0
        %1158 = vmatprep.subr.mxu0 0.0
        %1159 = vmatpush1.msra.mxu0 0.0
        %1160 = vmatprep.subr.mxu0 0.0
        %1161 = vmatpush1.msra.mxu0 0.0
        %1162 = vmatprep.subr.mxu0 0.0
        %1163 = vmatpush1.msra.mxu0 0.0
        %1164 = vmatprep.subr.mxu0 0.0
        %1165 = vmatpush1.msra.mxu0 0.0
        %1166 = vmatprep.subr.mxu0 0.0
        %1167 = vmatpush1.msra.mxu0 0.0
        %1168 = vmatprep.subr.mxu0 0.0
        %1169 = vmatpush1.msra.mxu0 0.0
        %1170 = vmatprep.subr.mxu0 0.0
        %1171 = vmatpush1.msra.mxu0 0.0
        %1172 = vmatprep.subr.mxu0 0.0
        %1173 = vmatpush1.msra.mxu0 0.0
        %1174 = vmatprep.subr.mxu0 0.0
        %1175 = vmatpush1.msra.mxu0 0.0
        %1176 = vmatprep.subr.mxu0 0.0
        %1177 = vmatpush1.msra.mxu0 0.0
        %1178 = vmatprep.subr.mxu0 0.0
        %1179 = vmatpush1.msra.mxu0 0.0
        %1180 = vmatprep.subr.mxu0 0.0
        %1181 = vmatpush1.msra.mxu0 0.0
        %1182 = vmatprep.mubr.f32.mxu0 0.0
        %1183 = vmatmul.mubr.f32.gmra.mrb[0].mxu0 %v1116
        %v1184 = vpop.f32.mrb[0].mxu0
        %v1185 = vadd.f32 0.0, %v1184
        %v1186 = vpop.f32.mrb[0].mxu0
        %1187 = vdwg.mxu0
        %v1188 = vrcp.pop %v1185
        %v1189 = vmul.f32 %v1114, %v1188
        %1194 = vrot.lane.b32.xlu0 %v1012, 64
        %v1195 = vpop.permute.xlu0 %1194
        %1196 = vrot.lane.b32.xlu0 %v1013, 64
        %v1197 = vpop.permute.xlu0 %1196
        %1198 = vrot.lane.b32.xlu0 %v1014, 64
        %v1199 = vpop.permute.xlu0 %1198
        %1200 = vrot.lane.b32.xlu0 %v1015, 64
        %v1201 = vpop.permute.xlu0 %1200
        %v1207 = vsel %vm892, %v1189, 0
        %1209 = vmatprep.subr.mxu0 0.0
        %1210 = vmatpush1.msra.mxu0 %v1195
        %1211 = vmatprep.subr.mxu0 0.0
        %1212 = vmatpush1.msra.mxu0 %v1197
        %1213 = vmatprep.subr.mxu0 0.0
        %1214 = vmatpush1.msra.mxu0 %v1199
        %1215 = vmatprep.subr.mxu0 0.0
        %1216 = vmatpush1.msra.mxu0 %v1201
        %1217 = vmatprep.subr.mxu0 0.0
        %1218 = vmatpush1.msra.mxu0 0.0
        %1219 = vmatprep.subr.mxu0 0.0
        %1220 = vmatpush1.msra.mxu0 0.0
        %1221 = vmatprep.subr.mxu0 0.0
        %1222 = vmatpush1.msra.mxu0 0.0
        %1223 = vmatprep.subr.mxu0 0.0
        %1224 = vmatpush1.msra.mxu0 0.0
        %1225 = vmatprep.subr.mxu0 0.0
        %1226 = vmatpush1.msra.mxu0 0.0
        %1227 = vmatprep.subr.mxu0 0.0
        %1228 = vmatpush1.msra.mxu0 0.0
        %1229 = vmatprep.subr.mxu0 0.0
        %1230 = vmatpush1.msra.mxu0 0.0
        %1231 = vmatprep.subr.mxu0 0.0
        %1232 = vmatpush1.msra.mxu0 0.0
        %1233 = vmatprep.subr.mxu0 0.0
        %1234 = vmatpush1.msra.mxu0 0.0
        %1235 = vmatprep.subr.mxu0 0.0
        %1236 = vmatpush1.msra.mxu0 0.0
        %1237 = vmatprep.subr.mxu0 0.0
        %1238 = vmatpush1.msra.mxu0 0.0
        %1239 = vmatprep.subr.mxu0 0.0
        %1240 = vmatpush1.msra.mxu0 0.0
        %1241 = vmatprep.subr.mxu0 0.0
        %1242 = vmatpush1.msra.mxu0 0.0
        %1243 = vmatprep.subr.mxu0 0.0
        %1244 = vmatpush1.msra.mxu0 0.0
        %1245 = vmatprep.subr.mxu0 0.0
        %1246 = vmatpush1.msra.mxu0 0.0
        %1247 = vmatprep.subr.mxu0 0.0
        %1248 = vmatpush1.msra.mxu0 0.0
        %1249 = vmatprep.subr.mxu0 0.0
        %1250 = vmatpush1.msra.mxu0 0.0
        %1251 = vmatprep.subr.mxu0 0.0
        %1252 = vmatpush1.msra.mxu0 0.0
        %1253 = vmatprep.subr.mxu0 0.0
        %1254 = vmatpush1.msra.mxu0 0.0
        %1255 = vmatprep.subr.mxu0 0.0
        %1256 = vmatpush1.msra.mxu0 0.0
        %1257 = vmatprep.subr.mxu0 0.0
        %1258 = vmatpush1.msra.mxu0 0.0
        %1259 = vmatprep.subr.mxu0 0.0
        %1260 = vmatpush1.msra.mxu0 0.0
        %1261 = vmatprep.subr.mxu0 0.0
        %1262 = vmatpush1.msra.mxu0 0.0
        %1263 = vmatprep.subr.mxu0 0.0
        %1264 = vmatpush1.msra.mxu0 0.0
        %1265 = vmatprep.subr.mxu0 0.0
        %1266 = vmatpush1.msra.mxu0 0.0
        %1267 = vmatprep.subr.mxu0 0.0
        %1268 = vmatpush1.msra.mxu0 0.0
        %1269 = vmatprep.subr.mxu0 0.0
        %1270 = vmatpush1.msra.mxu0 0.0
        %1271 = vmatprep.subr.mxu0 0.0
        %1272 = vmatpush1.msra.mxu0 0.0
        %1273 = vmatprep.mubr.f32.mxu0 0.0
        %1274 = vmatmul.mubr.f32.gmra.mrb[0].mxu0 %v1207
        %v1275 = vpop.f32.mrb[0].mxu0
        %v1276 = vadd.f32 0.0, %v1275
        %v1277 = vpop.f32.mrb[0].mxu0
        %1278 = vdwg.mxu0
        %v1280 = vlaneseq
        %v1281 = vshrl.u32 %v1280, 7
        %v1282 = vsub.s32 0, %v1281
        %v1283 = vrot.slane %v979, %v1282
        %v1286 = vsel %vm892, %v1276, 0
        %1288 = vmatprep.subr.mxu0 0.0
        %1289 = vmatpush1.msra.mxu0 %v975
        %1290 = vmatprep.subr.mxu0 0.0
        %1291 = vmatpush1.msra.mxu0 %v976
        %1292 = vmatprep.subr.mxu0 0.0
        %1293 = vmatpush1.msra.mxu0 %v977
        %1294 = vmatprep.subr.mxu0 0.0
        %1295 = vmatpush1.msra.mxu0 %v978
        %1296 = vmatprep.subr.mxu0 0.0
        %1297 = vmatpush1.msra.mxu0 0.0
        %1298 = vmatprep.subr.mxu0 0.0
        %1299 = vmatpush1.msra.mxu0 0.0
        %1300 = vmatprep.subr.mxu0 0.0
        %1301 = vmatpush1.msra.mxu0 0.0
        %1302 = vmatprep.subr.mxu0 0.0
        %1303 = vmatpush1.msra.mxu0 0.0
        %1304 = vmatprep.subr.mxu0 0.0
        %1305 = vmatpush1.msra.mxu0 0.0
        %1306 = vmatprep.subr.mxu0 0.0
        %1307 = vmatpush1.msra.mxu0 0.0
        %1308 = vmatprep.subr.mxu0 0.0
        %1309 = vmatpush1.msra.mxu0 0.0
        %1310 = vmatprep.subr.mxu0 0.0
        %1311 = vmatpush1.msra.mxu0 0.0
        %1312 = vmatprep.subr.mxu0 0.0
        %1313 = vmatpush1.msra.mxu0 0.0
        %1314 = vmatprep.subr.mxu0 0.0
        %1315 = vmatpush1.msra.mxu0 0.0
        %1316 = vmatprep.subr.mxu0 0.0
        %1317 = vmatpush1.msra.mxu0 0.0
        %1318 = vmatprep.subr.mxu0 0.0
        %1319 = vmatpush1.msra.mxu0 0.0
        %1320 = vmatprep.subr.mxu0 0.0
        %1321 = vmatpush1.msra.mxu0 0.0
        %1322 = vmatprep.subr.mxu0 0.0
        %1323 = vmatpush1.msra.mxu0 0.0
        %1324 = vmatprep.subr.mxu0 0.0
        %1325 = vmatpush1.msra.mxu0 0.0
        %1326 = vmatprep.subr.mxu0 0.0
        %1327 = vmatpush1.msra.mxu0 0.0
        %1328 = vmatprep.subr.mxu0 0.0
        %1329 = vmatpush1.msra.mxu0 0.0
        %1330 = vmatprep.subr.mxu0 0.0
        %1331 = vmatpush1.msra.mxu0 0.0
        %1332 = vmatprep.subr.mxu0 0.0
        %1333 = vmatpush1.msra.mxu0 0.0
        %1334 = vmatprep.subr.mxu0 0.0
        %1335 = vmatpush1.msra.mxu0 0.0
        %1336 = vmatprep.subr.mxu0 0.0
        %1337 = vmatpush1.msra.mxu0 0.0
        %1338 = vmatprep.subr.mxu0 0.0
        %1339 = vmatpush1.msra.mxu0 0.0
        %1340 = vmatprep.subr.mxu0 0.0
        %1341 = vmatpush1.msra.mxu0 0.0
        %1342 = vmatprep.subr.mxu0 0.0
        %1343 = vmatpush1.msra.mxu0 0.0
        %1344 = vmatprep.subr.mxu0 0.0
        %1345 = vmatpush1.msra.mxu0 0.0
        %1346 = vmatprep.subr.mxu0 0.0
        %1347 = vmatpush1.msra.mxu0 0.0
        %1348 = vmatprep.subr.mxu0 0.0
        %1349 = vmatpush1.msra.mxu0 0.0
        %1350 = vmatprep.subr.mxu0 0.0
        %1351 = vmatpush1.msra.mxu0 0.0
        %1352 = vmatprep.mubr.f32.mxu0 0.0
        %1353 = vmatmul.mubr.f32.gmra.mrb[0].mxu0 %v1286
        %v1354 = vpop.f32.mrb[0].mxu0
        %v1355 = vadd.f32 %v1283, %v1354
        %v1356 = vpop.f32.mrb[0].mxu0
        %1357 = vdwg.mxu0
        %v1358 = vadd.f32 %v835, %v1355
        %v1359 = vsel %vm892, %v1358, 0.0
        %1360 = vadd.xlane.f32.xlu0 %v1359
        %v1361 = vpop.xlane.xlu0 %1360
        %v1362 = vrcp.pop 32.0
        %v1363 = vmul.f32 %v1361, %v1362
        %v1364 = vsub.f32 %v1358, %v1363
        %v1365 = vmul.f32 %v1364, %v1364
        %v1366 = vsel %vm892, %v1365, 0.0
        %1367 = vadd.xlane.f32.xlu0 %v1366
        %v1368 = vpop.xlane.xlu0 %1367
        %v1369 = vmul.f32 %v1368, %v1362
        %v1370 = vadd.f32 %v1369, 1e-05
        %v1371 = vrsqrt.pop %v1370
        %v1372 = vmul.f32 %v1364, %v1371
        %v1373 = vlaneseq
        %v1374 = vshrl.u32 %v1373, 7
        %v1375 = vsub.s32 0, %v1374
        %v1376 = vrot.slane %v838, %v1375
        %v1377 = vmul.f32 %v1372, %v1376
        %v1378 = vlaneseq
        %v1379 = vshrl.u32 %v1378, 7
        %v1380 = vsub.s32 1, %v1379
        %v1381 = vrot.slane %v838, %v1380
        %v1382 = vadd.f32 %v1377, %v1381
        %v1383 = vld [vmem:[%s8] sm:$0xff]
        %v1384 = vld [vmem:[%s8 + $0x8] sm:$0xff]
        %v1385 = vld [vmem:[%s8 + $0x10] sm:$0xff]
        %v1386 = vld [vmem:[%s8 + $0x18] sm:$0xff]
        %v1387 = vld [vmem:[%s9] sm:$0x1]
        %v1389 = vlaneseq
        %v1390 = vshrl.u32 %v1389, 7
        %v1391 = vsub.s32 0, %v1390
        %v1392 = vrot.slane %v1387, %v1391
        %v1395 = vsel %vm892, %v1382, 0
        %1397 = vmatprep.subr.mxu0 0.0
        %1398 = vmatpush1.msra.mxu0 %v1383
        %1399 = vmatprep.subr.mxu0 0.0
        %1400 = vmatpush1.msra.mxu0 %v1384
        %1401 = vmatprep.subr.mxu0 0.0
        %1402 = vmatpush1.msra.mxu0 %v1385
        %1403 = vmatprep.subr.mxu0 0.0
        %1404 = vmatpush1.msra.mxu0 %v1386
        %1405 = vmatprep.subr.mxu0 0.0
        %1406 = vmatpush1.msra.mxu0 0.0
        %1407 = vmatprep.subr.mxu0 0.0
        %1408 = vmatpush1.msra.mxu0 0.0
        %1409 = vmatprep.subr.mxu0 0.0
        %1410 = vmatpush1.msra.mxu0 0.0
        %1411 = vmatprep.subr.mxu0 0.0
        %1412 = vmatpush1.msra.mxu0 0.0
        %1413 = vmatprep.subr.mxu0 0.0
        %1414 = vmatpush1.msra.mxu0 0.0
        %1415 = vmatprep.subr.mxu0 0.0
        %1416 = vmatpush1.msra.mxu0 0.0
        %1417 = vmatprep.subr.mxu0 0.0
        %1418 = vmatpush1.msra.mxu0 0.0
        %1419 = vmatprep.subr.mxu0 0.0
        %1420 = vmatpush1.msra.mxu0 0.0
        %1421 = vmatprep.subr.mxu0 0.0
        %1422 = vmatpush1.msra.mxu0 0.0
        %1423 = vmatprep.subr.mxu0 0.0
        %1424 = vmatpush1.msra.mxu0 0.0
        %1425 = vmatprep.subr.mxu0 0.0
        %1426 = vmatpush1.msra.mxu0 0.0
        %1427 = vmatprep.subr.mxu0 0.0
        %1428 = vmatpush1.msra.mxu0 0.0
        %1429 = vmatprep.subr.mxu0 0.0
        %1430 = vmatpush1.msra.mxu0 0.0
        %1431 = vmatprep.subr.mxu0 0.0
        %1432 = vmatpush1.msra.mxu0 0.0
        %1433 = vmatprep.subr.mxu0 0.0
        %1434 = vmatpush1.msra.mxu0 0.0
        %1435 = vmatprep.subr.mxu0 0.0
        %1436 = vmatpush1.msra.mxu0 0.0
        %1437 = vmatprep.subr.mxu0 0.0
        %1438 = vmatpush1.msra.mxu0 0.0
        %1439 = vmatprep.subr.mxu0 0.0
        %1440 = vmatpush1.msra.mxu0 0.0
        %1441 = vmatprep.subr.mxu0 0.0
        %1442 = vmatpush1.msra.mxu0 0.0
        %1443 = vmatprep.subr.mxu0 0.0
        %1444 = vmatpush1.msra.mxu0 0.0
        %1445 = vmatprep.subr.mxu0 0.0
        %1446 = vmatpush1.msra.mxu0 0.0
        %1447 = vmatprep.subr.mxu0 0.0
        %1448 = vmatpush1.msra.mxu0 0.0
        %1449 = vmatprep.subr.mxu0 0.0
        %1450 = vmatpush1.msra.mxu0 0.0
        %1451 = vmatprep.subr.mxu0 0.0
        %1452 = vmatpush1.msra.mxu0 0.0
        %1453 = vmatprep.subr.mxu0 0.0
        %1454 = vmatpush1.msra.mxu0 0.0
        %1455 = vmatprep.subr.mxu0 0.0
        %1456 = vmatpush1.msra.mxu0 0.0
        %1457 = vmatprep.subr.mxu0 0.0
        %1458 = vmatpush1.msra.mxu0 0.0
        %1459 = vmatprep.subr.mxu0 0.0
        %1460 = vmatpush1.msra.mxu0 0.0
        %1461 = vmatprep.mubr.f32.mxu0 0.0
        %1462 = vmatmul.mubr.f32.gmra.mrb[0].mxu0 %v1395
        %v1463 = vpop.f32.mrb[0].mxu0
        %v1464 = vadd.f32 %v1392, %v1463
        %v1465 = vpop.f32.mrb[0].mxu0
        %1466 = vdwg.mxu0
        %v1467 = vmul.f32 %v1464, 0.35355338
        %v1468 = vld [vmem:[%s10] sm:$0xff]
        %v1469 = vld [vmem:[%s10 + $0x8] sm:$0xff]
        %v1470 = vld [vmem:[%s10 + $0x10] sm:$0xff]
        %v1471 = vld [vmem:[%s10 + $0x18] sm:$0xff]
        %v1472 = vld [vmem:[%s11] sm:$0x1]
        %v1474 = vlaneseq
        %v1475 = vshrl.u32 %v1474, 7
        %v1476 = vsub.s32 0, %v1475
        %v1477 = vrot.slane %v1472, %v1476
        %v1480 = vsel %vm892, %v836, 0
        %v1483 = vsel %vm892, %v837, 0
        %1485 = vmatprep.subr.mxu0 0.0
        %1486 = vmatpush1.msra.mxu0 %v1468
        %1487 = vmatprep.subr.mxu0 0.0
        %1488 = vmatpush1.msra.mxu0 %v1469
        %1489 = vmatprep.subr.mxu0 0.0
        %1490 = vmatpush1.msra.mxu0 %v1470
        %1491 = vmatprep.subr.mxu0 0.0
        %1492 = vmatpush1.msra.mxu0 %v1471
        %1493 = vmatprep.subr.mxu0 0.0
        %1494 = vmatpush1.msra.mxu0 0.0
        %1495 = vmatprep.subr.mxu0 0.0
        %1496 = vmatpush1.msra.mxu0 0.0
        %1497 = vmatprep.subr.mxu0 0.0
        %1498 = vmatpush1.msra.mxu0 0.0
        %1499 = vmatprep.subr.mxu0 0.0
        %1500 = vmatpush1.msra.mxu0 0.0
        %1501 = vmatprep.subr.mxu0 0.0
        %1502 = vmatpush1.msra.mxu0 0.0
        %1503 = vmatprep.subr.mxu0 0.0
        %1504 = vmatpush1.msra.mxu0 0.0
        %1505 = vmatprep.subr.mxu0 0.0
        %1506 = vmatpush1.msra.mxu0 0.0
        %1507 = vmatprep.subr.mxu0 0.0
        %1508 = vmatpush1.msra.mxu0 0.0
        %1509 = vmatprep.subr.mxu0 0.0
        %1510 = vmatpush1.msra.mxu0 0.0
        %1511 = vmatprep.subr.mxu0 0.0
        %1512 = vmatpush1.msra.mxu0 0.0
        %1513 = vmatprep.subr.mxu0 0.0
        %1514 = vmatpush1.msra.mxu0 0.0
        %1515 = vmatprep.subr.mxu0 0.0
        %1516 = vmatpush1.msra.mxu0 0.0
        %1517 = vmatprep.subr.mxu0 0.0
        %1518 = vmatpush1.msra.mxu0 0.0
        %1519 = vmatprep.subr.mxu0 0.0
        %1520 = vmatpush1.msra.mxu0 0.0
        %1521 = vmatprep.subr.mxu0 0.0
        %1522 = vmatpush1.msra.mxu0 0.0
        %1523 = vmatprep.subr.mxu0 0.0
        %1524 = vmatpush1.msra.mxu0 0.0
        %1525 = vmatprep.subr.mxu0 0.0
        %1526 = vmatpush1.msra.mxu0 0.0
        %1527 = vmatprep.subr.mxu0 0.0
        %1528 = vmatpush1.msra.mxu0 0.0
        %1529 = vmatprep.subr.mxu0 0.0
        %1530 = vmatpush1.msra.mxu0 0.0
        %1531 = vmatprep.subr.mxu0 0.0
        %1532 = vmatpush1.msra.mxu0 0.0
        %1533 = vmatprep.subr.mxu0 0.0
        %1534 = vmatpush1.msra.mxu0 0.0
        %1535 = vmatprep.subr.mxu0 0.0
        %1536 = vmatpush1.msra.mxu0 0.0
        %1537 = vmatprep.subr.mxu0 0.0
        %1538 = vmatpush1.msra.mxu0 0.0
        %1539 = vmatprep.subr.mxu0 0.0
        %1540 = vmatpush1.msra.mxu0 0.0
        %1541 = vmatprep.subr.mxu0 0.0
        %1542 = vmatpush1.msra.mxu0 0.0
        %1543 = vmatprep.subr.mxu0 0.0
        %1544 = vmatpush1.msra.mxu0 0.0
        %1545 = vmatprep.subr.mxu0 0.0
        %1546 = vmatpush1.msra.mxu0 0.0
        %1547 = vmatprep.subr.mxu0 0.0
        %1548 = vmatpush1.msra.mxu0 0.0
        %1549 = vmatprep.mubr.f32.mxu0 0.0
        %1550 = vmatmul.mubr.f32.gmra.mrb[0].mxu0 %v1480
        %v1551 = vpop.f32.mrb[0].mxu0
        %v1552 = vadd.f32 %v1477, %v1551
        %v1553 = vpop.f32.mrb[0].mxu0
        %1554 = vmatprep.mubr.f32.mxu0 0.0
        %1555 = vmatmul.mubr.f32.gmra.mrb[0].mxu0 %v1483
        %v1556 = vpop.f32.mrb[0].mxu0
        %v1557 = vadd.f32 %v1477, %v1556
        %v1558 = vpop.f32.mrb[0].mxu0
        %1559 = vdwg.mxu0
        %v1560 = vld [vmem:[%s21] sm:$0xff]
        %v1561 = vld [vmem:[%s21 + $0x8] sm:$0xff]
        %v1562 = vld [vmem:[%s21 + $0x10] sm:$0xff]
        %v1563 = vld [vmem:[%s21 + $0x18] sm:$0xff]
        %v1564 = vld [vmem:[%s21 + $0x20] sm:$0xff]
        %v1565 = vld [vmem:[%s22] sm:$0xff]
        %v1566 = vld [vmem:[%s22 + $0x8] sm:$0xff]
        %v1567 = vld [vmem:[%s22 + $0x10] sm:$0xff]
        %v1568 = vld [vmem:[%s22 + $0x18] sm:$0xff]
        %v1569 = vld [vmem:[%s22 + $0x20] sm:$0xff]
        %v1570 = vld [vmem:[%s12] sm:$0xff]
        %v1571 = vld [vmem:[%s12 + $0x8] sm:$0xff]
        %v1572 = vld [vmem:[%s12 + $0x10] sm:$0xff]
        %v1573 = vld [vmem:[%s12 + $0x18] sm:$0xff]
        %v1574 = vld [vmem:[%s13] sm:$0x1]
        %vm1577 = vcmask 1041408
        %v1578 = vrot.slane %v1552, 6
        %v1579 = vrot.slane %v1557, 6
        %v1580 = vsel %vm1577, %v1578, %v1579
        %vm1583 = vcmask 1043456
        %v1584 = vrot.slane %v1552, 4
        %v1585 = vrot.slane %v1557, 4
        %v1586 = vsel %vm1583, %v1584, %v1585
        %vm1589 = vcmask 1045504
        %v1590 = vrot.slane %v1552, 2
        %v1591 = vrot.slane %v1557, 2
        %v1592 = vsel %vm1589, %v1590, %v1591
        %v1595 = vsel %vm1577, %v1557, %v1578
        %v1596 = vsel %vm1583, %v1580, %v1584
        %v1597 = vsel %vm1589, %v1586, %v1590
        %v1598 = vmul.f32 %v1552, %v1560
        %v1599 = vmul.f32 %v1595, %v1561
        %v1600 = vmul.f32 %v1596, %v1562
        %v1601 = vmul.f32 %v1597, %v1563
        %v1602 = vmul.f32 %v1592, %v1564
        %1608 = vrot.lane.b32.xlu0 %v1560, 32
        %v1609 = vpop.permute.xlu0 %1608
        %1610 = vrot.lane.b32.xlu0 %v1561, 32
        %v1611 = vpop.permute.xlu0 %1610
        %1612 = vrot.lane.b32.xlu0 %v1562, 32
        %v1613 = vpop.permute.xlu0 %1612
        %1614 = vrot.lane.b32.xlu0 %v1563, 32
        %v1615 = vpop.permute.xlu0 %1614
        %1616 = vrot.lane.b32.xlu0 %v1564, 32
        %v1617 = vpop.permute.xlu0 %1616
        %v1623 = vmul.f32 %v1552, %v1609
        %v1624 = vmul.f32 %v1595, %v1611
        %v1625 = vmul.f32 %v1596, %v1613
        %v1626 = vmul.f32 %v1597, %v1615
        %v1627 = vmul.f32 %v1592, %v1617
        %v1628 = vlaneseq
        %v1629 = vshrl.u32 %v1628, 7
        %v1630 = vsub.s32 0, %v1629
        %v1631 = vrot.slane %v880, %v1630
        %v1633 = vsel %vm892, %v1467, 0
        %v1636 = vsel %vm892, %v1598, 0
        %v1639 = vsel %vm892, %v1599, 0
        %v1642 = vsel %vm892, %v1600, 0
        %v1645 = vsel %vm892, %v1601, 0
        %v1648 = vsel %vm892, %v1602, 0
        %1650 = vmatprep.subr.mxu0 0.0
        %1651 = vmatpush1.xpose.msra.mxu0 %v1636
        %1652 = vmatprep.subr.mxu0 0.0
        %1653 = vmatpush1.xpose.msra.mxu0 %v1639
        %1654 = vmatprep.subr.mxu0 0.0
        %1655 = vmatpush1.xpose.msra.mxu0 %v1642
        %1656 = vmatprep.subr.mxu0 0.0
        %1657 = vmatpush1.xpose.msra.mxu0 %v1645
        %1658 = vmatprep.subr.mxu0 0.0
        %1659 = vmatpush1.xpose.msra.mxu0 %v1648
        %1660 = vmatprep.subr.mxu0 0.0
        %1661 = vmatpush1.xpose.msra.mxu0 0.0
        %1662 = vmatprep.subr.mxu0 0.0
        %1663 = vmatpush1.xpose.msra.mxu0 0.0
        %1664 = vmatprep.subr.mxu0 0.0
        %1665 = vmatpush1.xpose.msra.mxu0 0.0
        %1666 = vmatprep.subr.mxu0 0.0
        %1667 = vmatpush1.xpose.msra.mxu0 0.0
        %1668 = vmatprep.subr.mxu0 0.0
        %1669 = vmatpush1.xpose.msra.mxu0 0.0
        %1670 = vmatprep.subr.mxu0 0.0
        %1671 = vmatpush1.xpose.msra.mxu0 0.0
        %1672 = vmatprep.subr.mxu0 0.0
        %1673 = vmatpush1.xpose.msra.mxu0 0.0
        %1674 = vmatprep.subr.mxu0 0.0
        %1675 = vmatpush1.xpose.msra.mxu0 0.0
        %1676 = vmatprep.subr.mxu0 0.0
        %1677 = vmatpush1.xpose.msra.mxu0 0.0
        %1678 = vmatprep.subr.mxu0 0.0
        %1679 = vmatpush1.xpose.msra.mxu0 0.0
        %1680 = vmatprep.subr.mxu0 0.0
        %1681 = vmatpush1.xpose.msra.mxu0 0.0
        %1682 = vmatprep.subr.mxu0 0.0
        %1683 = vmatpush1.xpose.msra.mxu0 0.0
        %1684 = vmatprep.subr.mxu0 0.0
        %1685 = vmatpush1.xpose.msra.mxu0 0.0
        %1686 = vmatprep.subr.mxu0 0.0
        %1687 = vmatpush1.xpose.msra.mxu0 0.0
        %1688 = vmatprep.subr.mxu0 0.0
        %1689 = vmatpush1.xpose.msra.mxu0 0.0
        %1690 = vmatprep.subr.mxu0 0.0
        %1691 = vmatpush1.xpose.msra.mxu0 0.0
        %1692 = vmatprep.subr.mxu0 0.0
        %1693 = vmatpush1.xpose.msra.mxu0 0.0
        %1694 = vmatprep.subr.mxu0 0.0
        %1695 = vmatpush1.xpose.msra.mxu0 0.0
        %1696 = vmatprep.subr.mxu0 0.0
        %1697 = vmatpush1.xpose.msra.mxu0 0.0
        %1698 = vmatprep.subr.mxu0 0.0
        %1699 = vmatpush1.xpose.msra.mxu0 0.0
        %1700 = vmatprep.subr.mxu0 0.0
        %1701 = vmatpush1.xpose.msra.mxu0 0.0
        %1702 = vmatprep.subr.mxu0 0.0
        %1703 = vmatpush1.xpose.msra.mxu0 0.0
        %1704 = vmatprep.subr.mxu0 0.0
        %1705 = vmatpush1.xpose.msra.mxu0 0.0
        %1706 = vmatprep.subr.mxu0 0.0
        %1707 = vmatpush1.xpose.msra.mxu0 0.0
        %1708 = vmatprep.subr.mxu0 0.0
        %1709 = vmatpush1.xpose.msra.mxu0 0.0
        %1710 = vmatprep.subr.mxu0 0.0
        %1711 = vmatpush1.xpose.msra.mxu0 0.0
        %1712 = vmatprep.subr.mxu0 0.0
        %1713 = vmatpush1.xpose.msra.mxu0 0.0
        %1714 = vmatprep.mubr.f32.mxu0 0.0
        %1715 = vmatmul.mubr.f32.gmra.mrb[0].mxu0 %v1633
        %v1716 = vpop.f32.mrb[0].mxu0
        %v1717 = vadd.f32 %v1631, %v1716
        %v1718 = vpop.f32.mrb[0].mxu0
        %1719 = vdwg.mxu0
        %vm1720 = vcmask 326656
        %v1721 = vsel %vm1720, %v1717, -inf
        %1722 = vmax.xlane.f32.xlu0 %v1721
        %v1723 = vpop.xlane.xlu0 %1722
        %v1724 = vsub.f32 %v1717, %v1723
        %v1725 = vmul.f32 %v1724, 1.442695
        %v1726 = vpow.pop %v1725
        %v1728 = vsel %vm1720, %v1726, 0
        %1730 = vmatprep.subr.mxu0 0.0
        %1731 = vmatpush1.msra.mxu0 %v1565
        %1732 = vmatprep.subr.mxu0 0.0
        %1733 = vmatpush1.msra.mxu0 %v1566
        %1734 = vmatprep.subr.mxu0 0.0
        %1735 = vmatpush1.msra.mxu0 %v1567
        %1736 = vmatprep.subr.mxu0 0.0
        %1737 = vmatpush1.msra.mxu0 %v1568
        %1738 = vmatprep.subr.mxu0 0.0
        %1739 = vmatpush1.msra.mxu0 %v1569
        %1740 = vmatprep.subr.mxu0 0.0
        %1741 = vmatpush1.msra.mxu0 0.0
        %1742 = vmatprep.subr.mxu0 0.0
        %1743 = vmatpush1.msra.mxu0 0.0
        %1744 = vmatprep.subr.mxu0 0.0
        %1745 = vmatpush1.msra.mxu0 0.0
        %1746 = vmatprep.subr.mxu0 0.0
        %1747 = vmatpush1.msra.mxu0 0.0
        %1748 = vmatprep.subr.mxu0 0.0
        %1749 = vmatpush1.msra.mxu0 0.0
        %1750 = vmatprep.subr.mxu0 0.0
        %1751 = vmatpush1.msra.mxu0 0.0
        %1752 = vmatprep.subr.mxu0 0.0
        %1753 = vmatpush1.msra.mxu0 0.0
        %1754 = vmatprep.subr.mxu0 0.0
        %1755 = vmatpush1.msra.mxu0 0.0
        %1756 = vmatprep.subr.mxu0 0.0
        %1757 = vmatpush1.msra.mxu0 0.0
        %1758 = vmatprep.subr.mxu0 0.0
        %1759 = vmatpush1.msra.mxu0 0.0
        %1760 = vmatprep.subr.mxu0 0.0
        %1761 = vmatpush1.msra.mxu0 0.0
        %1762 = vmatprep.subr.mxu0 0.0
        %1763 = vmatpush1.msra.mxu0 0.0
        %1764 = vmatprep.subr.mxu0 0.0
        %1765 = vmatpush1.msra.mxu0 0.0
        %1766 = vmatprep.subr.mxu0 0.0
        %1767 = vmatpush1.msra.mxu0 0.0
        %1768 = vmatprep.subr.mxu0 0.0
        %1769 = vmatpush1.msra.mxu0 0.0
        %1770 = vmatprep.subr.mxu0 0.0
        %1771 = vmatpush1.msra.mxu0 0.0
        %1772 = vmatprep.subr.mxu0 0.0
        %1773 = vmatpush1.msra.mxu0 0.0
        %1774 = vmatprep.subr.mxu0 0.0
        %1775 = vmatpush1.msra.mxu0 0.0
        %1776 = vmatprep.subr.mxu0 0.0
        %1777 = vmatpush1.msra.mxu0 0.0
        %1778 = vmatprep.subr.mxu0 0.0
        %1779 = vmatpush1.msra.mxu0 0.0
        %1780 = vmatprep.subr.mxu0 0.0
        %1781 = vmatpush1.msra.mxu0 0.0
        %1782 = vmatprep.subr.mxu0 0.0
        %1783 = vmatpush1.msra.mxu0 0.0
        %1784 = vmatprep.subr.mxu0 0.0
        %1785 = vmatpush1.msra.mxu0 0.0
        %1786 = vmatprep.subr.mxu0 0.0
        %1787 = vmatpush1.msra.mxu0 0.0
        %1788 = vmatprep.subr.mxu0 0.0
        %1789 = vmatpush1.msra.mxu0 0.0
        %1790 = vmatprep.subr.mxu0 0.0
        %1791 = vmatpush1.msra.mxu0 0.0
        %1792 = vmatprep.subr.mxu0 0.0
        %1793 = vmatpush1.msra.mxu0 0.0
        %1794 = vmatprep.mubr.f32.mxu0 0.0
        %1795 = vmatmul.mubr.f32.gmra.mrb[0].mxu0 %v1728
        %v1796 = vpop.f32.mrb[0].mxu0
        %v1797 = vadd.f32 0.0, %v1796
        %v1798 = vpop.f32.mrb[0].mxu0
        %1799 = vdwg.mxu0
        %v1800 = vrcp.pop %v1797
        %v1801 = vmul.f32 %v1726, %v1800
        %1807 = vrot.lane.b32.xlu0 %v1623, 96
        %v1808 = vpop.permute.xlu0 %1807
        %1809 = vrot.lane.b32.xlu0 %v1624, 96
        %v1810 = vpop.permute.xlu0 %1809
        %1811 = vrot.lane.b32.xlu0 %v1625, 96
        %v1812 = vpop.permute.xlu0 %1811
        %1813 = vrot.lane.b32.xlu0 %v1626, 96
        %v1814 = vpop.permute.xlu0 %1813
        %1815 = vrot.lane.b32.xlu0 %v1627, 96
        %v1816 = vpop.permute.xlu0 %1815
        %v1823 = vsel %vm1720, %v1801, 0
        %1825 = vmatprep.subr.mxu0 0.0
        %1826 = vmatpush1.msra.mxu0 %v1808
        %1827 = vmatprep.subr.mxu0 0.0
        %1828 = vmatpush1.msra.mxu0 %v1810
        %1829 = vmatprep.subr.mxu0 0.0
        %1830 = vmatpush1.msra.mxu0 %v1812
        %1831 = vmatprep.subr.mxu0 0.0
        %1832 = vmatpush1.msra.mxu0 %v1814
        %1833 = vmatprep.subr.mxu0 0.0
        %1834 = vmatpush1.msra.mxu0 %v1816
        %1835 = vmatprep.subr.mxu0 0.0
        %1836 = vmatpush1.msra.mxu0 0.0
        %1837 = vmatprep.subr.mxu0 0.0
        %1838 = vmatpush1.msra.mxu0 0.0
        %1839 = vmatprep.subr.mxu0 0.0
        %1840 = vmatpush1.msra.mxu0 0.0
        %1841 = vmatprep.subr.mxu0 0.0
        %1842 = vmatpush1.msra.mxu0 0.0
        %1843 = vmatprep.subr.mxu0 0.0
        %1844 = vmatpush1.msra.mxu0 0.0
        %1845 = vmatprep.subr.mxu0 0.0
        %1846 = vmatpush1.msra.mxu0 0.0
        %1847 = vmatprep.subr.mxu0 0.0
        %1848 = vmatpush1.msra.mxu0 0.0
        %1849 = vmatprep.subr.mxu0 0.0
        %1850 = vmatpush1.msra.mxu0 0.0
        %1851 = vmatprep.subr.mxu0 0.0
        %1852 = vmatpush1.msra.mxu0 0.0
        %1853 = vmatprep.subr.mxu0 0.0
        %1854 = vmatpush1.msra.mxu0 0.0
        %1855 = vmatprep.subr.mxu0 0.0
        %1856 = vmatpush1.msra.mxu0 0.0
        %1857 = vmatprep.subr.mxu0 0.0
        %1858 = vmatpush1.msra.mxu0 0.0
        %1859 = vmatprep.subr.mxu0 0.0
        %1860 = vmatpush1.msra.mxu0 0.0
        %1861 = vmatprep.subr.mxu0 0.0
        %1862 = vmatpush1.msra.mxu0 0.0
        %1863 = vmatprep.subr.mxu0 0.0
        %1864 = vmatpush1.msra.mxu0 0.0
        %1865 = vmatprep.subr.mxu0 0.0
        %1866 = vmatpush1.msra.mxu0 0.0
        %1867 = vmatprep.subr.mxu0 0.0
        %1868 = vmatpush1.msra.mxu0 0.0
        %1869 = vmatprep.subr.mxu0 0.0
        %1870 = vmatpush1.msra.mxu0 0.0
        %1871 = vmatprep.subr.mxu0 0.0
        %1872 = vmatpush1.msra.mxu0 0.0
        %1873 = vmatprep.subr.mxu0 0.0
        %1874 = vmatpush1.msra.mxu0 0.0
        %1875 = vmatprep.subr.mxu0 0.0
        %1876 = vmatpush1.msra.mxu0 0.0
        %1877 = vmatprep.subr.mxu0 0.0
        %1878 = vmatpush1.msra.mxu0 0.0
        %1879 = vmatprep.subr.mxu0 0.0
        %1880 = vmatpush1.msra.mxu0 0.0
        %1881 = vmatprep.subr.mxu0 0.0
        %1882 = vmatpush1.msra.mxu0 0.0
        %1883 = vmatprep.subr.mxu0 0.0
        %1884 = vmatpush1.msra.mxu0 0.0
        %1885 = vmatprep.subr.mxu0 0.0
        %1886 = vmatpush1.msra.mxu0 0.0
        %1887 = vmatprep.subr.mxu0 0.0
        %1888 = vmatpush1.msra.mxu0 0.0
        %1889 = vmatprep.mubr.f32.mxu0 0.0
        %1890 = vmatmul.mubr.f32.gmra.mrb[0].mxu0 %v1823
        %v1891 = vpop.f32.mrb[0].mxu0
        %v1892 = vadd.f32 0.0, %v1891
        %v1893 = vpop.f32.mrb[0].mxu0
        %1894 = vdwg.mxu0
        %v1896 = vlaneseq
        %v1897 = vshrl.u32 %v1896, 7
        %v1898 = vsub.s32 0, %v1897
        %v1899 = vrot.slane %v1574, %v1898
        %v1902 = vsel %vm892, %v1892, 0
        %1904 = vmatprep.subr.mxu0 0.0
        %1905 = vmatpush1.msra.mxu0 %v1570
        %1906 = vmatprep.subr.mxu0 0.0
        %1907 = vmatpush1.msra.mxu0 %v1571
        %1908 = vmatprep.subr.mxu0 0.0
        %1909 = vmatpush1.msra.mxu0 %v1572
        %1910 = vmatprep.subr.mxu0 0.0
        %1911 = vmatpush1.msra.mxu0 %v1573
        %1912 = vmatprep.subr.mxu0 0.0
        %1913 = vmatpush1.msra.mxu0 0.0
        %1914 = vmatprep.subr.mxu0 0.0
        %1915 = vmatpush1.msra.mxu0 0.0
        %1916 = vmatprep.subr.mxu0 0.0
        %1917 = vmatpush1.msra.mxu0 0.0
        %1918 = vmatprep.subr.mxu0 0.0
        %1919 = vmatpush1.msra.mxu0 0.0
        %1920 = vmatprep.subr.mxu0 0.0
        %1921 = vmatpush1.msra.mxu0 0.0
        %1922 = vmatprep.subr.mxu0 0.0
        %1923 = vmatpush1.msra.mxu0 0.0
        %1924 = vmatprep.subr.mxu0 0.0
        %1925 = vmatpush1.msra.mxu0 0.0
        %1926 = vmatprep.subr.mxu0 0.0
        %1927 = vmatpush1.msra.mxu0 0.0
        %1928 = vmatprep.subr.mxu0 0.0
        %1929 = vmatpush1.msra.mxu0 0.0
        %1930 = vmatprep.subr.mxu0 0.0
        %1931 = vmatpush1.msra.mxu0 0.0
        %1932 = vmatprep.subr.mxu0 0.0
        %1933 = vmatpush1.msra.mxu0 0.0
        %1934 = vmatprep.subr.mxu0 0.0
        %1935 = vmatpush1.msra.mxu0 0.0
        %1936 = vmatprep.subr.mxu0 0.0
        %1937 = vmatpush1.msra.mxu0 0.0
        %1938 = vmatprep.subr.mxu0 0.0
        %1939 = vmatpush1.msra.mxu0 0.0
        %1940 = vmatprep.subr.mxu0 0.0
        %1941 = vmatpush1.msra.mxu0 0.0
        %1942 = vmatprep.subr.mxu0 0.0
        %1943 = vmatpush1.msra.mxu0 0.0
        %1944 = vmatprep.subr.mxu0 0.0
        %1945 = vmatpush1.msra.mxu0 0.0
        %1946 = vmatprep.subr.mxu0 0.0
        %1947 = vmatpush1.msra.mxu0 0.0
        %1948 = vmatprep.subr.mxu0 0.0
        %1949 = vmatpush1.msra.mxu0 0.0
        %1950 = vmatprep.subr.mxu0 0.0
        %1951 = vmatpush1.msra.mxu0 0.0
        %1952 = vmatprep.subr.mxu0 0.0
        %1953 = vmatpush1.msra.mxu0 0.0
        %1954 = vmatprep.subr.mxu0 0.0
        %1955 = vmatpush1.msra.mxu0 0.0
        %1956 = vmatprep.subr.mxu0 0.0
        %1957 = vmatpush1.msra.mxu0 0.0
        %1958 = vmatprep.subr.mxu0 0.0
        %1959 = vmatpush1.msra.mxu0 0.0
        %1960 = vmatprep.subr.mxu0 0.0
        %1961 = vmatpush1.msra.mxu0 0.0
        %1962 = vmatprep.subr.mxu0 0.0
        %1963 = vmatpush1.msra.mxu0 0.0
        %1964 = vmatprep.subr.mxu0 0.0
        %1965 = vmatpush1.msra.mxu0 0.0
        %1966 = vmatprep.subr.mxu0 0.0
        %1967 = vmatpush1.msra.mxu0 0.0
        %1968 = vmatprep.mubr.f32.mxu0 0.0
        %1969 = vmatmul.mubr.f32.gmra.mrb[0].mxu0 %v1902
        %v1970 = vpop.f32.mrb[0].mxu0
        %v1971 = vadd.f32 %v1899, %v1970
        %v1972 = vpop.f32.mrb[0].mxu0
        %1973 = vdwg.mxu0
        %v1974 = vadd.f32 %v1382, %v1971
        %v1975 = vsel %vm892, %v1974, 0.0
        %1976 = vadd.xlane.f32.xlu0 %v1975
        %v1977 = vpop.xlane.xlu0 %1976
        %v1978 = vmul.f32 %v1977, %v1362
        %v1979 = vsub.f32 %v1974, %v1978
        %v1980 = vmul.f32 %v1979, %v1979
        %v1981 = vsel %vm892, %v1980, 0.0
        %1982 = vadd.xlane.f32.xlu0 %v1981
        %v1983 = vpop.xlane.xlu0 %1982
        %v1984 = vmul.f32 %v1983, %v1362
        %v1985 = vadd.f32 %v1984, 1e-05
        %v1986 = vrsqrt.pop %v1985
        %v1987 = vmul.f32 %v1979, %v1986
        %v1988 = vlaneseq
        %v1989 = vshrl.u32 %v1988, 7
        %v1990 = vsub.s32 2, %v1989
        %v1991 = vrot.slane %v838, %v1990
        %v1992 = vmul.f32 %v1987, %v1991
        %v1993 = vlaneseq
        %v1994 = vshrl.u32 %v1993, 7
        %v1995 = vsub.s32 3, %v1994
        %v1996 = vrot.slane %v838, %v1995
        %v1997 = vadd.f32 %v1992, %v1996
        %v1998 = vld [vmem:[%s14] sm:$0xff]
        %v1999 = vld [vmem:[%s14 + $0x8] sm:$0xff]
        %v2000 = vld [vmem:[%s14 + $0x10] sm:$0xff]
        %v2001 = vld [vmem:[%s14 + $0x18] sm:$0xff]
        %v2002 = vld [vmem:[%s15] sm:$0x1]
        %v2004 = vlaneseq
        %v2005 = vshrl.u32 %v2004, 7
        %v2006 = vsub.s32 0, %v2005
        %v2007 = vrot.slane %v2002, %v2006
        %v2010 = vsel %vm892, %v1997, 0
        %2012 = vmatprep.subr.mxu0 0.0
        %2013 = vmatpush1.msra.mxu0 %v1998
        %2014 = vmatprep.subr.mxu0 0.0
        %2015 = vmatpush1.msra.mxu0 %v1999
        %2016 = vmatprep.subr.mxu0 0.0
        %2017 = vmatpush1.msra.mxu0 %v2000
        %2018 = vmatprep.subr.mxu0 0.0
        %2019 = vmatpush1.msra.mxu0 %v2001
        %2020 = vmatprep.subr.mxu0 0.0
        %2021 = vmatpush1.msra.mxu0 0.0
        %2022 = vmatprep.subr.mxu0 0.0
        %2023 = vmatpush1.msra.mxu0 0.0
        %2024 = vmatprep.subr.mxu0 0.0
        %2025 = vmatpush1.msra.mxu0 0.0
        %2026 = vmatprep.subr.mxu0 0.0
        %2027 = vmatpush1.msra.mxu0 0.0
        %2028 = vmatprep.subr.mxu0 0.0
        %2029 = vmatpush1.msra.mxu0 0.0
        %2030 = vmatprep.subr.mxu0 0.0
        %2031 = vmatpush1.msra.mxu0 0.0
        %2032 = vmatprep.subr.mxu0 0.0
        %2033 = vmatpush1.msra.mxu0 0.0
        %2034 = vmatprep.subr.mxu0 0.0
        %2035 = vmatpush1.msra.mxu0 0.0
        %2036 = vmatprep.subr.mxu0 0.0
        %2037 = vmatpush1.msra.mxu0 0.0
        %2038 = vmatprep.subr.mxu0 0.0
        %2039 = vmatpush1.msra.mxu0 0.0
        %2040 = vmatprep.subr.mxu0 0.0
        %2041 = vmatpush1.msra.mxu0 0.0
        %2042 = vmatprep.subr.mxu0 0.0
        %2043 = vmatpush1.msra.mxu0 0.0
        %2044 = vmatprep.subr.mxu0 0.0
        %2045 = vmatpush1.msra.mxu0 0.0
        %2046 = vmatprep.subr.mxu0 0.0
        %2047 = vmatpush1.msra.mxu0 0.0
        %2048 = vmatprep.subr.mxu0 0.0
        %2049 = vmatpush1.msra.mxu0 0.0
        %2050 = vmatprep.subr.mxu0 0.0
        %2051 = vmatpush1.msra.mxu0 0.0
        %2052 = vmatprep.subr.mxu0 0.0
        %2053 = vmatpush1.msra.mxu0 0.0
        %2054 = vmatprep.subr.mxu0 0.0
        %2055 = vmatpush1.msra.mxu0 0.0
        %2056 = vmatprep.subr.mxu0 0.0
        %2057 = vmatpush1.msra.mxu0 0.0
        %2058 = vmatprep.subr.mxu0 0.0
        %2059 = vmatpush1.msra.mxu0 0.0
        %2060 = vmatprep.subr.mxu0 0.0
        %2061 = vmatpush1.msra.mxu0 0.0
        %2062 = vmatprep.subr.mxu0 0.0
        %2063 = vmatpush1.msra.mxu0 0.0
        %2064 = vmatprep.subr.mxu0 0.0
        %2065 = vmatpush1.msra.mxu0 0.0
        %2066 = vmatprep.subr.mxu0 0.0
        %2067 = vmatpush1.msra.mxu0 0.0
        %2068 = vmatprep.subr.mxu0 0.0
        %2069 = vmatpush1.msra.mxu0 0.0
        %2070 = vmatprep.subr.mxu0 0.0
        %2071 = vmatpush1.msra.mxu0 0.0
        %2072 = vmatprep.subr.mxu0 0.0
        %2073 = vmatpush1.msra.mxu0 0.0
        %2074 = vmatprep.subr.mxu0 0.0
        %2075 = vmatpush1.msra.mxu0 0.0
        %2076 = vmatprep.mubr.f32.mxu0 0.0
        %2077 = vmatmul.mubr.f32.gmra.mrb[0].mxu0 %v2010
        %v2078 = vpop.f32.mrb[0].mxu0
        %v2079 = vadd.f32 %v2007, %v2078
        %v2080 = vpop.f32.mrb[0].mxu0
        %2081 = vdwg.mxu0
        %v2082 = vmax.f32 %v2079, 0.0
        %v2083 = vld [vmem:[%s16] sm:$0xff]
        %v2084 = vld [vmem:[%s16 + $0x8] sm:$0xff]
        %v2085 = vld [vmem:[%s16 + $0x10] sm:$0xff]
        %v2086 = vld [vmem:[%s16 + $0x18] sm:$0xff]
        %v2087 = vld [vmem:[%s16 + $0x20] sm:$0xff]
        %v2088 = vld [vmem:[%s16 + $0x28] sm:$0xff]
        %v2089 = vld [vmem:[%s16 + $0x30] sm:$0xff]
        %v2090 = vld [vmem:[%s16 + $0x38] sm:$0xff]
        %v2091 = vld [vmem:[%s17] sm:$0x1]
        %v2093 = vlaneseq
        %v2094 = vshrl.u32 %v2093, 7
        %v2095 = vsub.s32 0, %v2094
        %v2096 = vrot.slane %v2091, %v2095
        %vm2098 = vcmask 523264
        %v2100 = vsel %vm2098, %v2082, 0
        %2102 = vmatprep.subr.mxu0 0.0
        %2103 = vmatpush1.msra.mxu0 %v2083
        %2104 = vmatprep.subr.mxu0 0.0
        %2105 = vmatpush1.msra.mxu0 %v2084
        %2106 = vmatprep.subr.mxu0 0.0
        %2107 = vmatpush1.msra.mxu0 %v2085
        %2108 = vmatprep.subr.mxu0 0.0
        %2109 = vmatpush1.msra.mxu0 %v2086
        %2110 = vmatprep.subr.mxu0 0.0
        %2111 = vmatpush1.msra.mxu0 %v2087
        %2112 = vmatprep.subr.mxu0 0.0
        %2113 = vmatpush1.msra.mxu0 %v2088
        %2114 = vmatprep.subr.mxu0 0.0
        %2115 = vmatpush1.msra.mxu0 %v2089
        %2116 = vmatprep.subr.mxu0 0.0
        %2117 = vmatpush1.msra.mxu0 %v2090
        %2118 = vmatprep.subr.mxu0 0.0
        %2119 = vmatpush1.msra.mxu0 0.0
        %2120 = vmatprep.subr.mxu0 0.0
        %2121 = vmatpush1.msra.mxu0 0.0
        %2122 = vmatprep.subr.mxu0 0.0
        %2123 = vmatpush1.msra.mxu0 0.0
        %2124 = vmatprep.subr.mxu0 0.0
        %2125 = vmatpush1.msra.mxu0 0.0
        %2126 = vmatprep.subr.mxu0 0.0
        %2127 = vmatpush1.msra.mxu0 0.0
        %2128 = vmatprep.subr.mxu0 0.0
        %2129 = vmatpush1.msra.mxu0 0.0
        %2130 = vmatprep.subr.mxu0 0.0
        %2131 = vmatpush1.msra.mxu0 0.0
        %2132 = vmatprep.subr.mxu0 0.0
        %2133 = vmatpush1.msra.mxu0 0.0
        %2134 = vmatprep.subr.mxu0 0.0
        %2135 = vmatpush1.msra.mxu0 0.0
        %2136 = vmatprep.subr.mxu0 0.0
        %2137 = vmatpush1.msra.mxu0 0.0
        %2138 = vmatprep.subr.mxu0 0.0
        %2139 = vmatpush1.msra.mxu0 0.0
        %2140 = vmatprep.subr.mxu0 0.0
        %2141 = vmatpush1.msra.mxu0 0.0
        %2142 = vmatprep.subr.mxu0 0.0
        %2143 = vmatpush1.msra.mxu0 0.0
        %2144 = vmatprep.subr.mxu0 0.0
        %2145 = vmatpush1.msra.mxu0 0.0
        %2146 = vmatprep.subr.mxu0 0.0
        %2147 = vmatpush1.msra.mxu0 0.0
        %2148 = vmatprep.subr.mxu0 0.0
        %2149 = vmatpush1.msra.mxu0 0.0
        %2150 = vmatprep.subr.mxu0 0.0
        %2151 = vmatpush1.msra.mxu0 0.0
        %2152 = vmatprep.subr.mxu0 0.0
        %2153 = vmatpush1.msra.mxu0 0.0
        %2154 = vmatprep.subr.mxu0 0.0
        %2155 = vmatpush1.msra.mxu0 0.0
        %2156 = vmatprep.subr.mxu0 0.0
        %2157 = vmatpush1.msra.mxu0 0.0
        %2158 = vmatprep.subr.mxu0 0.0
        %2159 = vmatpush1.msra.mxu0 0.0
        %2160 = vmatprep.subr.mxu0 0.0
        %2161 = vmatpush1.msra.mxu0 0.0
        %2162 = vmatprep.subr.mxu0 0.0
        %2163 = vmatpush1.msra.mxu0 0.0
        %2164 = vmatprep.subr.mxu0 0.0
        %2165 = vmatpush1.msra.mxu0 0.0
        %2166 = vmatprep.mubr.f32.mxu0 0.0
        %2167 = vmatmul.mubr.f32.gmra.mrb[0].mxu0 %v2100
        %v2168 = vpop.f32.mrb[0].mxu0
        %v2169 = vadd.f32 %v2096, %v2168
        %v2170 = vpop.f32.mrb[0].mxu0
        %2171 = vdwg.mxu0
        %v2172 = vadd.f32 %v1997, %v2169
        %v2173 = vsel %vm892, %v2172, 0.0
        %2174 = vadd.xlane.f32.xlu0 %v2173
        %v2175 = vpop.xlane.xlu0 %2174
        %v2176 = vmul.f32 %v2175, %v1362
        %v2177 = vsub.f32 %v2172, %v2176
        %v2178 = vmul.f32 %v2177, %v2177
        %v2179 = vsel %vm892, %v2178, 0.0
        %2180 = vadd.xlane.f32.xlu0 %v2179
        %v2181 = vpop.xlane.xlu0 %2180
        %v2182 = vmul.f32 %v2181, %v1362
        %v2183 = vadd.f32 %v2182, 1e-05
        %v2184 = vrsqrt.pop %v2183
        %v2185 = vmul.f32 %v2177, %v2184
        %v2186 = vlaneseq
        %v2187 = vshrl.u32 %v2186, 7
        %v2188 = vsub.s32 4, %v2187
        %v2189 = vrot.slane %v838, %v2188
        %v2190 = vmul.f32 %v2185, %v2189
        %v2191 = vlaneseq
        %v2192 = vshrl.u32 %v2191, 7
        %v2193 = vsub.s32 5, %v2192
        %v2194 = vrot.slane %v838, %v2193
        %v2195 = vadd.f32 %v2190, %v2194
        %2196 = vst.msk [vmem:[%s818] sm:$0xff] %vm892, %v2195
        %2197 = vst.msk [vmem:[%s825] sm:$0xff] %vm875, %v1801
        %2198 = vrot.lane.b32.xlu0 %v1801, 118
        %v2199 = vpop.permute.xlu0 %2198
        %s2201 = scalar_lea.vmem %s825, 8 [#allocation8]
        %2202 = vst.msk [vmem:[%s2201] sm:$0xff] %vm875, %v2199
        %2203 = vrot.lane.b32.xlu0 %v1801, 108
        %v2204 = vpop.permute.xlu0 %2203
        %s2206 = scalar_lea.vmem %s825, 16 [#allocation8]
        %2207 = vst.msk [vmem:[%s2206] sm:$0xff] %vm875, %v2204
        %2208 = vrot.lane.b32.xlu0 %v1801, 98
        %v2209 = vpop.permute.xlu0 %2208
        %s2211 = scalar_lea.vmem %s825, 24 [#allocation8]
        %2212 = vst.msk [vmem:[%s2211] sm:$0xff] %vm875, %v2209
        %s2213 = sand.u32 %s559, 1
        %s2214 = scalar_lea.sflag [#allocation4], %s2213
        %s2215 = sand.u32 %s559, 1
        %s2216 = smul.addr %s2215, 8
        %s2217 = scalar_lea.vmem [#allocation7], %s2216
        %s2218 = sand.u32 %s585, 1
        %s2219 = scalar_lea.sflag [#allocation9], %s2218
        %s2220 = sand.u32 %s585, 1
        %s2221 = smul.addr %s2220, 32
        %s2222 = scalar_lea.vmem [#allocation8], %s2221
        // Predicated region
        $region121: #{_decoder_layer_impl.1} parent=111 // pred_check
          %p2223 = pneg %p569
        $region122: #{_decoder_layer_impl.1} parent=111 // pred_check_branch
          %2225 = sbr.rel (%p2223) target = $region124
        $region123: #{_decoder_layer_impl.1} parent=111 // pred_region
          %s2227 = ssub.s32 128, 128
          %2228 = vsyncadd %s2214, %s2227
          %s2229 = smul.addr %s48, 128
          %s2230 = scalar_lea.hbm %s23, %s2229
          %s2232 = sshll.u32 %s2217, 4
          %s2233 = int_to_ptr.vmem [resolvable:$true] %s2232
          %2235 = dma.vmem_to_hbm [thread:$0]  %s2233, 128, %s2230, %s2214
        $region124: #{_decoder_layer_impl.1} parent=111 // pred_fallthru
          _
        // Predicated region
        $region125: #{_decoder_layer_impl.1} parent=111 // pred_check
          %p2236 = pneg %p595
        $region126: #{_decoder_layer_impl.1} parent=111 // pred_check_branch
          %2238 = sbr.rel (%p2236) target = $region128
        $region127: #{_decoder_layer_impl.1} parent=111 // pred_region
          %s2240 = ssub.s32 512, 512
          %2241 = vsyncadd %s2219, %s2240
          %s2242 = smul.addr %s48, 4
          %s2243 = smul.addr %s2242, 128
          %s2244 = scalar_lea.hbm %s24, %s2243
          %s2245 = sshll.u32 %s2222, 4
          %s2246 = int_to_ptr.vmem [resolvable:$true] %s2245
          %2251 = dma.vmem_to_hbm [thread:$0]  %s2246, 512, %s2244, %s2219, 128, 128, 8
        $region128: #{_decoder_layer_impl.1} parent=111 // pred_fallthru
          _
      $region112: #{_decoder_layer_impl.1} parent=5 // pred_fallthru
        _
      %p2252 = scmp.le.s32.totalorder 2, %s43
      // Predicated region
      $region129: #{_decoder_layer_impl.1} parent=5 // pred_check
        %p2253 = pneg %p2252
      $region130: #{_decoder_layer_impl.1} parent=5 // pred_check_branch
        %2255 = sbr.rel (%p2253) target = $region132
      $region131: #{_decoder_layer_impl.1} parent=5 // pred_region
        %s2256 = ssub.s32 %s43, 2
        // Predicated region
        $region133: #{_decoder_layer_impl.1} parent=131 // pred_check
          %p2257 = pneg %p575
        $region134: #{_decoder_layer_impl.1} parent=131 // pred_check_branch
          %2259 = sbr.rel (%p2257) target = $region136
        $region135: #{_decoder_layer_impl.1} parent=131 // pred_region
          %s2260 = sand.u32 %s560, 1
          %s2261 = scalar_lea.sflag [#allocation4], %s2260
          %s2262 = sand.u32 %s560, 1
          %s2263 = smul.addr %s2262, 8
          %s2264 = scalar_lea.vmem [#allocation7], %s2263
          %2265 = dma.done %s2261, 128
        $region136: #{_decoder_layer_impl.1} parent=131 // pred_fallthru
          _
        // Predicated region
        $region137: #{_decoder_layer_impl.1} parent=131 // pred_check
          %p2266 = pneg %p601
        $region138: #{_decoder_layer_impl.1} parent=131 // pred_check_branch
          %2268 = sbr.rel (%p2266) target = $region140
        $region139: #{_decoder_layer_impl.1} parent=131 // pred_region
          %s2269 = sand.u32 %s586, 1
          %s2270 = scalar_lea.sflag [#allocation9], %s2269
          %s2271 = sand.u32 %s586, 1
          %s2272 = smul.addr %s2271, 32
          %s2273 = scalar_lea.vmem [#allocation8], %s2272
          %2274 = dma.done %s2270, 512
        $region140: #{_decoder_layer_impl.1} parent=131 // pred_fallthru
          _
      $region132: #{_decoder_layer_impl.1} parent=5 // pred_fallthru
        _
    $region6: #{_decoder_layer_impl.1} parent=1 // loop_footer
      %s47 = sadd.s32 1, %s43
    $region7: #{_decoder_layer_impl.1} parent=1 // loop_footer_branch
      %42 = sbr.rel target = $region3
    $region8: #{_decoder_layer_impl.1} parent=1 // loop_exit
      _
    %2275 = vsyncpa [#allocation3], 1
    %s2276 = scalar_lea.sflag [#allocation3], 1
    %2277 = vsyncpa %s2276, 1
    %2278 = vsyncpa [#allocation6], 1
    %s2279 = scalar_lea.sflag [#allocation6], 1
    %2280 = vsyncpa %s2279, 1
    %2281 = vsyncpa [#allocation4], 1
    %s2282 = scalar_lea.sflag [#allocation4], 1
    %2283 = vsyncpa %s2282, 1
    %2284 = vsyncpa [#allocation9], 1
    %s2285 = scalar_lea.sflag [#allocation9], 1
    %2286 = vsyncpa %s2285, 1

</llo_original>
